<compile_context>
chip_gen: v5e
topology: v5e:2x2
jax: 0.10.0
libtpu: 0.0.40
codegen_flags: <defaults>
</compile_context>

<pallas_src>
import math
import functools

import jax
import jax.numpy as jnp
from jax.experimental import pallas as pl
from jax.experimental.pallas import tpu as pltpu


def attn_block_kernel(x_ref, gnw_ref, gnb_ref, mem_ref,
                      wqkv_ref, bqkv_ref, wproj_ref, bproj_ref,
                      o_ref, h_ref, attn_ref, qkv_ref,
                      *, num_heads, head_dim, heads_per_grp, bt, seq, cg, eps,
                      softmax_bf16):
    S = seq
    C = num_heads * head_dim
    gw = heads_per_grp * head_dim            # lane-aligned head-group width
    n_grp = num_heads // heads_per_grp

    gnw = gnw_ref[...]                        # (1, C) f32
    gnb = gnb_ref[...]                        # (1, C) f32
    mem = mem_ref[...]                        # (C, G) f32, 0/1 group membership

    inv_count = 1.0 / float(S * cg)
    dn_cg = (((1,), (0,)), ((), ()))          # (bt,C) x (C,G)   -> (bt,G)
    dn_gc = (((1,), (1,)), ((), ()))          # (bt,G) x (C,G)^T -> (bt,C)

    # ---------------- GroupNorm: two-pass (group mean, then centered variance) ----------
    # Pass 1: per-sample channel sums -> batched group means (tiny dots, all samples at once).
    cs_rows = [jnp.sum(x_ref[b * S:(b + 1) * S, :], axis=0, keepdims=True)
               for b in range(bt)]
    cs = cs_rows[0] if bt == 1 else jnp.concatenate(cs_rows, axis=0)              # (bt, C)
    mean_g = jax.lax.dot_general(cs, mem, dn_cg,
                                 preferred_element_type=jnp.float32) * inv_count  # (bt, G)
    mean_c = jax.lax.dot_general(mean_g, mem, dn_gc,
                                 preferred_element_type=jnp.float32)              # (bt, C)

    # Pass 2: centered sums of squares -> batched group inverse std (no cancellation).
    csq_rows = []
    for b in range(bt):
        xc = x_ref[b * S:(b + 1) * S, :] - mean_c[b:b + 1, :]
        csq_rows.append(jnp.sum(xc * xc, axis=0, keepdims=True))
    csq = csq_rows[0] if bt == 1 else jnp.concatenate(csq_rows, axis=0)            # (bt, C)
    var_g = jax.lax.dot_general(csq, mem, dn_cg,
                                preferred_element_type=jnp.float32) * inv_count    # (bt, G)
    inv_g = jax.lax.rsqrt(var_g + eps)
    inv_c = jax.lax.dot_general(inv_g, mem, dn_gc,
                                preferred_element_type=jnp.float32)                # (bt, C)
    scale_c = inv_c * gnw                                                          # (bt, C)
    shift_c = gnb - mean_c * scale_c                                               # (bt, C)

    # Pass 3: normalize and store bf16 activations.
    for b in range(bt):
        rows = slice(b * S, (b + 1) * S)
        hb = x_ref[rows, :] * scale_c[b:b + 1, :] + shift_c[b:b + 1, :]
        h_ref[rows, :] = hb.astype(jnp.bfloat16)

    # ---------------- qkv projection over all bt*S tokens -> bf16 scratch ---------------
    qkv = jnp.dot(h_ref[...], wqkv_ref[...],
                  preferred_element_type=jnp.float32) + bqkv_ref[...]   # (bt*S, 3C) f32
    qkv_ref[...] = qkv.astype(jnp.bfloat16)

    # ---------------- attention: per sample, lane-aligned head groups --------------------
    p_dtype = jnp.bfloat16 if softmax_bf16 else jnp.float32
    dn_qk = (((1,), (1,)), ((), ()))          # (S,hd) x (S,hd)^T -> (S,S)

    def attn_one_sample(b):
        if isinstance(b, int):
            r0 = b * S
        else:
            r0 = pl.multiple_of(b * S, 8) if S % 8 == 0 else b * S
        rows = pl.ds(r0, S)
        for g in range(n_grp):
            c0 = g * gw
            outs = []
            for hh in range(heads_per_grp):
                h0 = c0 + hh * head_dim
                # 1/sqrt(head_dim) already folded into the q columns of wqkv/bqkv.
                qh = qkv_ref[rows, 0 * C + h0:0 * C + h0 + head_dim]   # (S, hd) bf16
                kh = qkv_ref[rows, 1 * C + h0:1 * C + h0 + head_dim]
                vh = qkv_ref[rows, 2 * C + h0:2 * C + h0 + head_dim]
                s = jax.lax.dot_general(qh, kh, dn_qk,
                                        preferred_element_type=jnp.float32)  # (S, S) f32
                m = jnp.max(s, axis=-1, keepdims=True)
                p = jnp.exp((s - m).astype(p_dtype))                         # unnormalized
                l = jnp.sum(p.astype(jnp.float32), axis=-1, keepdims=True)   # (S, 1) f32
                oh = jnp.dot(p.astype(jnp.bfloat16), vh,
                             preferred_element_type=jnp.float32)             # (S, hd) f32
                outs.append(oh * pl.reciprocal(l, approx=True))              # EUP normalize
            og = outs[0] if heads_per_grp == 1 else jnp.concatenate(outs, axis=-1)
            attn_ref[rows, c0:c0 + gw] = og.astype(jnp.bfloat16)             # lane-dense store

    if bt > 1 and S % 8 == 0:
        def body(b, carry):
            attn_one_sample(b)
            return carry
        jax.lax.fori_loop(0, bt, body, 0)
    else:
        for b in range(bt):
            attn_one_sample(b)

    # ---------------- output projection + residual (re-read x from the ref) --------------
    proj = jnp.dot(attn_ref[...], wproj_ref[...],
                   preferred_element_type=jnp.float32) + bproj_ref[...]       # (bt*S, C)
    o_ref[...] = x_ref[...] + proj


def _pick_bt(B, S):
    """Samples per grid step: fill the MXU but keep >=2 grid steps when B>=2 (v7x megacore)."""
    if B >= 2:
        cands = [d for d in range(1, B // 2 + 1) if B % d == 0]
    else:
        cands = [1]
    aligned = [d for d in cands if (d * S) % 8 == 0]
    if aligned:
        cands = aligned
    else:
        # TODO(synk): pad S up to a multiple of 8 instead of a monolithic full-array block.
        cands = [B]
    hit = [d for d in cands if d * S >= 256]
    bt = min(hit) if hit else max(cands)
    return bt, cands


def attn_block(x_nchw, params, *, num_heads):
    B, C, H, W = x_nchw.shape
    S = H * W
    assert C % num_heads == 0
    head_dim = C // num_heads
    eps = 1e-5

    G = min(C, 32)
    assert C % G == 0
    Cg = C // G

    # NCHW -> token-major (B*S, C); lane axis = channels.
    # TODO(synk): optionally accept x in bf16 here to halve HBM traffic on v5e (verify tol).
    x_tok = jnp.transpose(x_nchw, (0, 2, 3, 1)).reshape(B * S, C).astype(jnp.float32)

    # Group-membership matrix (C, G): mem[c, g] = 1 iff channel c belongs to group g.
    grp = jnp.arange(C) // Cg
    mem = (grp[:, None] == jnp.arange(G)[None, :]).astype(jnp.float32)

    gnw = params["gn_w"].reshape(1, C).astype(jnp.float32)
    gnb = params["gn_b"].reshape(1, C).astype(jnp.float32)

    # Fold 1/sqrt(head_dim) into the q columns of the qkv projection (zero kernel cost).
    scale = 1.0 / math.sqrt(head_dim)
    wqkv = params["w_qkv"].astype(jnp.float32).at[:, :C].multiply(scale).astype(jnp.bfloat16)
    bqkv = params["b_qkv"].astype(jnp.float32).at[:C].multiply(scale).reshape(1, 3 * C)
    wproj = params["w_proj"].astype(jnp.bfloat16)
    bproj = params["b_proj"].reshape(1, C).astype(jnp.float32)

    # Head grouping: smallest divisor of num_heads whose width is a multiple of 128 lanes;
    # fall back to all heads (group spans the full C, which is also a lane-dense store).
    heads_per_grp = num_heads
    for cand in range(1, num_heads + 1):
        if num_heads % cand == 0 and (cand * head_dim) % 128 == 0:
            heads_per_grp = cand
            break

    Bt, cands = _pick_bt(B, S)

    # Generation-aware VMEM budget (v7x: 64 MiB physical vs 128 MiB on v5e/v6e).
    try:
        vmem_cap = int(pltpu.get_tpu_info().vmem_capacity_bytes)
    except Exception:
        vmem_cap = 64 * 1024 * 1024                     # conservative (v7x) fallback
    budget = (vmem_cap * 3) // 4                        # headroom for compiler scratch/pipeline

    def vmem_estimate(bt_):
        rows = bt_ * S
        return int(2 * 2 * rows * C * 4                 # x + out blocks, double-buffered f32
                   + 2 * rows * C * 2                   # h + attn bf16 scratch
                   + rows * 3 * C * 2                   # qkv bf16 scratch
                   + rows * 3 * C * 4                   # transient f32 qkv matmul result
                   + 2 * S * S * 4                      # score + prob tiles (one head live)
                   + 2 * (C * 3 * C * 2 + C * C * 2)    # weights (double-buffered)
                   + (4 * C + C * G) * 4)

    # Shrink Bt instead of raising the limit past the budget.
    while vmem_estimate(Bt) > budget:
        smaller = [d for d in cands if d < Bt]
        if not smaller:
            break
        Bt = max(smaller)

    # bf16 softmax numerator only where the EUP/VPU have bf16 paths (v6e / v7x).
    try:
        kind = jax.devices()[0].device_kind.lower()
    except Exception:
        kind = ""
    softmax_bf16 = not any(v in kind for v in ("v2", "v3", "v4", "v5"))

    kernel = functools.partial(
        attn_block_kernel, num_heads=num_heads, head_dim=head_dim,
        heads_per_grp=heads_per_grp, bt=Bt, seq=S, cg=Cg, eps=eps,
        softmax_bf16=softmax_bf16)

    flops = int(2 * B * (S * C * 3 * C + 2 * num_heads * S * S * head_dim + S * C * C))
    transcendentals = int(B * num_heads * S * S)
    bytes_accessed = int(2 * B * S * C * 4
                         + C * 3 * C * 2 + C * C * 2
                         + (3 * C + 4 * C) * 4 + C * G * 4)
    cost = pl.CostEstimate(flops=flops, transcendentals=transcendentals,
                           bytes_accessed=bytes_accessed)

    # Always set the scoped-VMEM limit (v5e default is only 16 MiB), capped at the budget.
    vmem_limit = int(min(budget, max(32 * 1024 * 1024, 2 * vmem_estimate(Bt))))

    # TODO(synk): grid-invariant operands (weights/biases/affine/membership) could be
    # single-buffered via pipeline_mode=pl.Buffered(1) for extra VMEM headroom.
    def const_spec(shape):
        return pl.BlockSpec(shape, lambda b: (0, 0))

    out = pl.pallas_call(
        kernel,
        out_shape=jax.ShapeDtypeStruct((B * S, C), jnp.float32),
        grid_spec=pltpu.PrefetchScalarGridSpec(
            num_scalar_prefetch=0,
            grid=(B // Bt,),
            in_specs=[
                pl.BlockSpec((Bt * S, C), lambda b: (b, 0)),    # x tokens
                const_spec((1, C)),                             # GroupNorm weight
                const_spec((1, C)),                             # GroupNorm bias
                const_spec((C, G)),                             # group membership
                const_spec((C, 3 * C)),                         # qkv weight (bf16, q-scaled)
                const_spec((1, 3 * C)),                         # qkv bias (q-scaled)
                const_spec((C, C)),                             # proj weight (bf16)
                const_spec((1, C)),                             # proj bias
            ],
            out_specs=pl.BlockSpec((Bt * S, C), lambda b: (b, 0)),
            scratch_shapes=[
                pltpu.VMEM((Bt * S, C), jnp.bfloat16),          # normalized activations h
                pltpu.VMEM((Bt * S, C), jnp.bfloat16),          # attention output slab
                pltpu.VMEM((Bt * S, 3 * C), jnp.bfloat16),      # qkv projection (bf16)
            ],
        ),
        compiler_params=pltpu.CompilerParams(
            dimension_semantics=("parallel",),
            vmem_limit_bytes=vmem_limit),
        cost_estimate=cost,
    )(x_tok, gnw, gnb, mem, wqkv, bqkv, wproj, bproj)

    # (B*S, C) -> NCHW
    return jnp.transpose(out.reshape(B, H, W, C), (0, 3, 1, 2))


def attn_block_reference(x_nchw, params, *, num_heads):
    """Pure-JAX reference mirroring the PyTorch forward exactly (f32)."""
    B, C, H, W = x_nchw.shape
    S = H * W
    head_dim = C // num_heads
    G = min(C, 32)
    Cg = C // G

    xr = x_nchw.reshape(B, G, Cg * H * W)
    mean = xr.mean(-1, keepdims=True)
    var = xr.var(-1, keepdims=True)
    xn = ((xr - mean) / jnp.sqrt(var + 1e-5)).reshape(B, C, H, W)
    xn = xn * params["gn_w"].reshape(1, C, 1, 1) + params["gn_b"].reshape(1, C, 1, 1)

    h = jnp.transpose(xn.reshape(B, C, S), (0, 2, 1))                 # (B, S, C)
    qkv = h @ params["w_qkv"] + params["b_qkv"]                       # (B, S, 3C)
    q, k, v = jnp.split(qkv, 3, axis=-1)

    def heads(t):  # (B, S, C) -> (B, nh, S, hd)
        return jnp.transpose(t.reshape(B, S, num_heads, head_dim), (0, 2, 1, 3))

    q, k, v = heads(q), heads(k), heads(v)
    s = jnp.einsum("bhqd,bhkd->bhqk", q, k) / math.sqrt(head_dim)
    p = jax.nn.softmax(s, axis=-1)
    o = jnp.einsum("bhqk,bhkd->bhqd", p, v)                           # (B, nh, S, hd)
    o = jnp.transpose(o, (0, 2, 1, 3)).reshape(B, H, W, C)
    o = o @ params["w_proj"] + params["b_proj"]                       # (B, H, W, C)
    return x_nchw + jnp.transpose(o, (0, 3, 1, 2))


def make_params(key, channels):
    C = channels
    k1, k2, k3, k4, k5, k6 = jax.random.split(key, 6)
    return {
        "gn_w": 1.0 + 0.1 * jax.random.normal(k1, (C,), jnp.float32),
        "gn_b": 0.1 * jax.random.normal(k2, (C,), jnp.float32),
        "w_qkv": 0.05 * jax.random.normal(k3, (C, 3 * C), jnp.float32),
        "b_qkv": 0.05 * jax.random.normal(k4, (3 * C,), jnp.float32),
        "w_proj": 0.05 * jax.random.normal(k5, (C, C), jnp.float32),
        "b_proj": 0.05 * jax.random.normal(k6, (C,), jnp.float32),
    }


if __name__ == "__main__":
    B, C, HW, NUM_HEADS = 2, 64, 8, 2      # AttnBlock(channels=64, width=8, num_heads=2)
    key = jax.random.PRNGKey(0)
    kx, kp = jax.random.split(key)
    x = jax.random.normal(kx, (B, C, HW, HW), jnp.float32)
    params = make_params(kp, C)

    out = attn_block(x, params, num_heads=NUM_HEADS)
    out = jax.block_until_ready(out)

    ref = attn_block_reference(x, params, num_heads=NUM_HEADS)
    assert out.shape == (B, C, HW, HW)
    # bf16 matmul operands (+ bf16 softmax numerator on v6e/v7x) + approx reciprocal
    # -> slightly looser tolerance than pure f32.
    assert jnp.allclose(out, ref, atol=2e-2, rtol=2e-2), float(jnp.max(jnp.abs(out - ref)))

    print("KERNEL_OK")
</pallas_src>

<mosaic_0001>
module attributes {stable_mosaic.version = 11 : i64} {
  func.func @attn_block_kernel(%arg0: i32, %arg1: memref<64x64xf32, #tpu.memory_space<vmem>>, %arg2: memref<1x64xf32, #tpu.memory_space<vmem>>, %arg3: memref<1x64xf32, #tpu.memory_space<vmem>>, %arg4: memref<64x32xf32, #tpu.memory_space<vmem>>, %arg5: memref<64x192xbf16, #tpu.memory_space<vmem>>, %arg6: memref<1x192xf32, #tpu.memory_space<vmem>>, %arg7: memref<64x64xbf16, #tpu.memory_space<vmem>>, %arg8: memref<1x64xf32, #tpu.memory_space<vmem>>, %arg9: memref<64x64xf32, #tpu.memory_space<vmem>>, %arg10: memref<64x64xbf16, #tpu.memory_space<vmem>>, %arg11: memref<64x64xbf16, #tpu.memory_space<vmem>>, %arg12: memref<64x192xbf16, #tpu.memory_space<vmem>>) attributes {dimension_semantics = [#tpu.dimension_semantics<parallel>], iteration_bounds = array<i64: 2>, scalar_prefetch = 0 : i64, scratch_operands = 3 : i64, tpu.core_type = #tpu.core_type<tc>, window_params = [{transform_indices = @transform_0, window_bounds = array<i64: 64, 64>}, {pipeline_mode = #tpu.pipeline_mode<synchronous>, transform_indices = @transform_1, window_bounds = array<i64: 1, 64>}, {pipeline_mode = #tpu.pipeline_mode<synchronous>, transform_indices = @transform_2, window_bounds = array<i64: 1, 64>}, {pipeline_mode = #tpu.pipeline_mode<synchronous>, transform_indices = @transform_3, window_bounds = array<i64: 64, 32>}, {pipeline_mode = #tpu.pipeline_mode<synchronous>, transform_indices = @transform_4, window_bounds = array<i64: 64, 192>}, {pipeline_mode = #tpu.pipeline_mode<synchronous>, transform_indices = @transform_5, window_bounds = array<i64: 1, 192>}, {pipeline_mode = #tpu.pipeline_mode<synchronous>, transform_indices = @transform_6, window_bounds = array<i64: 64, 64>}, {pipeline_mode = #tpu.pipeline_mode<synchronous>, transform_indices = @transform_7, window_bounds = array<i64: 1, 64>}, {transform_indices = @transform_8, window_bounds = array<i64: 64, 64>}]} {
    %c0 = arith.constant 0 : index
    %c0_0 = arith.constant 0 : index
    %0 = vector.load %arg2[%c0, %c0_0] : memref<1x64xf32, #tpu.memory_space<vmem>>, vector<1x64xf32>
    %c0_1 = arith.constant 0 : index
    %c0_2 = arith.constant 0 : index
    %1 = vector.load %arg3[%c0_1, %c0_2] : memref<1x64xf32, #tpu.memory_space<vmem>>, vector<1x64xf32>
    %c0_3 = arith.constant 0 : index
    %c0_4 = arith.constant 0 : index
    %2 = vector.load %arg4[%c0_3, %c0_4] : memref<64x32xf32, #tpu.memory_space<vmem>>, vector<64x32xf32>
    %c0_5 = arith.constant 0 : index
    %c0_6 = arith.constant 0 : index
    %3 = vector.load %arg1[%c0_5, %c0_6] : memref<64x64xf32, #tpu.memory_space<vmem>>, vector<64x64xf32>
    %cst = arith.constant dense<0.000000e+00> : vector<64xf32>
    %4 = vector.multi_reduction <add>, %3, %cst [0] : vector<64x64xf32> to vector<64xf32>
    %5 = vector.shape_cast %4 : vector<64xf32> to vector<1x64xf32>
    %cst_7 = arith.constant dense<0.000000e+00> : vector<1x32xf32>
    %6 = tpu.matmul %5, %2, %cst_7 {dimension_numbers = #tpu.dot_dimension_numbers<[1], [0], [0], [1], [0, 0, 1, 1], [], []>} : vector<1x64xf32>, vector<64x32xf32>, vector<1x32xf32> -> vector<1x32xf32>
    %cst_8 = arith.constant 7.812500e-03 : f32
    %7 = vector.broadcast %cst_8 : f32 to vector<1x32xf32>
    %8 = arith.mulf %6, %7 : vector<1x32xf32>
    %cst_9 = arith.constant dense<0.000000e+00> : vector<1x64xf32>
    %9 = tpu.matmul %8, %2, %cst_9 {dimension_numbers = #tpu.dot_dimension_numbers<[1], [1], [0], [0], [0, 0, 1, 0], [], []>} : vector<1x32xf32>, vector<64x32xf32>, vector<1x64xf32> -> vector<1x64xf32>
    %c0_10 = arith.constant 0 : index
    %c0_11 = arith.constant 0 : index
    %10 = vector.load %arg1[%c0_10, %c0_11] : memref<64x64xf32, #tpu.memory_space<vmem>>, vector<64x64xf32>
    %11 = vector.broadcast %9 : vector<1x64xf32> to vector<64x64xf32>
    %12 = arith.subf %10, %11 : vector<64x64xf32>
    %13 = arith.mulf %12, %12 : vector<64x64xf32>
    %cst_12 = arith.constant dense<0.000000e+00> : vector<64xf32>
    %14 = vector.multi_reduction <add>, %13, %cst_12 [0] : vector<64x64xf32> to vector<64xf32>
    %15 = vector.shape_cast %14 : vector<64xf32> to vector<1x64xf32>
    %cst_13 = arith.constant dense<0.000000e+00> : vector<1x32xf32>
    %16 = tpu.matmul %15, %2, %cst_13 {dimension_numbers = #tpu.dot_dimension_numbers<[1], [0], [0], [1], [0, 0, 1, 1], [], []>} : vector<1x64xf32>, vector<64x32xf32>, vector<1x32xf32> -> vector<1x32xf32>
    %cst_14 = arith.constant 7.812500e-03 : f32
    %17 = vector.broadcast %cst_14 : f32 to vector<1x32xf32>
    %18 = arith.mulf %16, %17 : vector<1x32xf32>
    %cst_15 = arith.constant 9.99999974E-6 : f32
    %19 = vector.broadcast %cst_15 : f32 to vector<1x32xf32>
    %20 = arith.addf %18, %19 : vector<1x32xf32>
    %21 = math.rsqrt %20 : vector<1x32xf32>
    %cst_16 = arith.constant dense<0.000000e+00> : vector<1x64xf32>
    %22 = tpu.matmul %21, %2, %cst_16 {dimension_numbers = #tpu.dot_dimension_numbers<[1], [1], [0], [0], [0, 0, 1, 0], [], []>} : vector<1x32xf32>, vector<64x32xf32>, vector<1x64xf32> -> vector<1x64xf32>
    %23 = arith.mulf %22, %0 : vector<1x64xf32>
    %24 = arith.mulf %9, %23 : vector<1x64xf32>
    %25 = arith.subf %1, %24 : vector<1x64xf32>
    %c0_17 = arith.constant 0 : index
    %c0_18 = arith.constant 0 : index
    %26 = vector.load %arg1[%c0_17, %c0_18] : memref<64x64xf32, #tpu.memory_space<vmem>>, vector<64x64xf32>
    %27 = vector.broadcast %23 : vector<1x64xf32> to vector<64x64xf32>
    %28 = arith.mulf %26, %27 : vector<64x64xf32>
    %29 = vector.broadcast %25 : vector<1x64xf32> to vector<64x64xf32>
    %30 = arith.addf %28, %29 : vector<64x64xf32>
    %31 = arith.truncf %30 : vector<64x64xf32> to vector<64x64xbf16>
    %c0_19 = arith.constant 0 : index
    %c0_20 = arith.constant 0 : index
    %32 = vector.load %arg10[%c0_19, %c0_20] : memref<64x64xbf16, #tpu.memory_space<vmem>>, vector<64x64xbf16>
    tpu.vector_store %arg10[%c0_19, %c0_20], %31 {strides = array<i32>} : memref<64x64xbf16, #tpu.memory_space<vmem>>, vector<64x64xbf16>,
    %c0_21 = arith.constant 0 : index
    %c0_22 = arith.constant 0 : index
    %33 = vector.load %arg10[%c0_21, %c0_22] : memref<64x64xbf16, #tpu.memory_space<vmem>>, vector<64x64xbf16>
    %c0_23 = arith.constant 0 : index
    %c0_24 = arith.constant 0 : index
    %34 = vector.load %arg5[%c0_23, %c0_24] : memref<64x192xbf16, #tpu.memory_space<vmem>>, vector<64x192xbf16>
    %cst_25 = arith.constant dense<0.000000e+00> : vector<64x192xf32>
    %35 = tpu.matmul %33, %34, %cst_25 {dimension_numbers = #tpu.dot_dimension_numbers<[1], [0], [0], [1], [0, 0, 1, 1], [], []>} : vector<64x64xbf16>, vector<64x192xbf16>, vector<64x192xf32> -> vector<64x192xf32>
    %c0_26 = arith.constant 0 : index
    %c0_27 = arith.constant 0 : index
    %36 = vector.load %arg6[%c0_26, %c0_27] : memref<1x192xf32, #tpu.memory_space<vmem>>, vector<1x192xf32>
    %37 = vector.broadcast %36 : vector<1x192xf32> to vector<64x192xf32>
    %38 = arith.addf %35, %37 : vector<64x192xf32>
    %39 = arith.truncf %38 : vector<64x192xf32> to vector<64x192xbf16>
    %c0_28 = arith.constant 0 : index
    %c0_29 = arith.constant 0 : index
    %40 = vector.load %arg12[%c0_28, %c0_29] : memref<64x192xbf16, #tpu.memory_space<vmem>>, vector<64x192xbf16>
    tpu.vector_store %arg12[%c0_28, %c0_29], %39 {strides = array<i32>} : memref<64x192xbf16, #tpu.memory_space<vmem>>, vector<64x192xbf16>,
    %c0_30 = arith.constant 0 : index
    %c0_31 = arith.constant 0 : index
    %41 = vector.load %arg12[%c0_30, %c0_31] : memref<64x192xbf16, #tpu.memory_space<vmem>>, vector<64x32xbf16>
    %c0_32 = arith.constant 0 : index
    %c64 = arith.constant 64 : index
    %42 = vector.load %arg12[%c0_32, %c64] : memref<64x192xbf16, #tpu.memory_space<vmem>>, vector<64x32xbf16>
    %c0_33 = arith.constant 0 : index
    %c128 = arith.constant 128 : index
    %43 = vector.load %arg12[%c0_33, %c128] : memref<64x192xbf16, #tpu.memory_space<vmem>>, vector<64x32xbf16>
    %cst_34 = arith.constant dense<0.000000e+00> : vector<64x64xf32>
    %44 = tpu.matmul %41, %42, %cst_34 {dimension_numbers = #tpu.dot_dimension_numbers<[1], [1], [0], [0], [0, 0, 1, 0], [], []>} : vector<64x32xbf16>, vector<64x32xbf16>, vector<64x64xf32> -> vector<64x64xf32>
    %cst_35 = arith.constant dense<0xFF800000> : vector<64xf32>
    %45 = vector.multi_reduction <maximumf>, %44, %cst_35 [1] : vector<64x64xf32> to vector<64xf32>
    %46 = vector.shape_cast %45 : vector<64xf32> to vector<64x1xf32>
    %47 = vector.broadcast %46 : vector<64x1xf32> to vector<64x64xf32>
    %48 = arith.subf %44, %47 : vector<64x64xf32>
    %49 = arith.truncf %48 : vector<64x64xf32> to vector<64x64xbf16>
    %50 = math.exp %49 : vector<64x64xbf16>
    %51 = arith.extf %50 : vector<64x64xbf16> to vector<64x64xf32>
    %cst_36 = arith.constant dense<0.000000e+00> : vector<64xf32>
    %52 = vector.multi_reduction <add>, %51, %cst_36 [1] : vector<64x64xf32> to vector<64xf32>
    %53 = vector.shape_cast %52 : vector<64xf32> to vector<64x1xf32>
    %cst_37 = arith.constant dense<0.000000e+00> : vector<64x32xf32>
    %54 = tpu.matmul %50, %43, %cst_37 {dimension_numbers = #tpu.dot_dimension_numbers<[1], [0], [0], [1], [0, 0, 1, 1], [], []>} : vector<64x64xbf16>, vector<64x32xbf16>, vector<64x32xf32> -> vector<64x32xf32>
    %55 = tpu.reciprocal %53 {approx = true} : vector<64x1xf32> -> vector<64x1xf32>
    %56 = vector.broadcast %55 : vector<64x1xf32> to vector<64x32xf32>
    %57 = arith.mulf %54, %56 : vector<64x32xf32>
    %c0_38 = arith.constant 0 : index
    %c32 = arith.constant 32 : index
    %58 = vector.load %arg12[%c0_38, %c32] : memref<64x192xbf16, #tpu.memory_space<vmem>>, vector<64x32xbf16>
    %c0_39 = arith.constant 0 : index
    %c96 = arith.constant 96 : index
    %59 = vector.load %arg12[%c0_39, %c96] : memref<64x192xbf16, #tpu.memory_space<vmem>>, vector<64x32xbf16>
    %c0_40 = arith.constant 0 : index
    %c160 = arith.constant 160 : index
    %60 = vector.load %arg12[%c0_40, %c160] : memref<64x192xbf16, #tpu.memory_space<vmem>>, vector<64x32xbf16>
    %cst_41 = arith.constant dense<0.000000e+00> : vector<64x64xf32>
    %61 = tpu.matmul %58, %59, %cst_41 {dimension_numbers = #tpu.dot_dimension_numbers<[1], [1], [0], [0], [0, 0, 1, 0], [], []>} : vector<64x32xbf16>, vector<64x32xbf16>, vector<64x64xf32> -> vector<64x64xf32>
    %cst_42 = arith.constant dense<0xFF800000> : vector<64xf32>
    %62 = vector.multi_reduction <maximumf>, %61, %cst_42 [1] : vector<64x64xf32> to vector<64xf32>
    %63 = vector.shape_cast %62 : vector<64xf32> to vector<64x1xf32>
    %64 = vector.broadcast %63 : vector<64x1xf32> to vector<64x64xf32>
    %65 = arith.subf %61, %64 : vector<64x64xf32>
    %66 = arith.truncf %65 : vector<64x64xf32> to vector<64x64xbf16>
    %67 = math.exp %66 : vector<64x64xbf16>
    %68 = arith.extf %67 : vector<64x64xbf16> to vector<64x64xf32>
    %cst_43 = arith.constant dense<0.000000e+00> : vector<64xf32>
    %69 = vector.multi_reduction <add>, %68, %cst_43 [1] : vector<64x64xf32> to vector<64xf32>
    %70 = vector.shape_cast %69 : vector<64xf32> to vector<64x1xf32>
    %cst_44 = arith.constant dense<0.000000e+00> : vector<64x32xf32>
    %71 = tpu.matmul %67, %60, %cst_44 {dimension_numbers = #tpu.dot_dimension_numbers<[1], [0], [0], [1], [0, 0, 1, 1], [], []>} : vector<64x64xbf16>, vector<64x32xbf16>, vector<64x32xf32> -> vector<64x32xf32>
    %72 = tpu.reciprocal %70 {approx = true} : vector<64x1xf32> -> vector<64x1xf32>
    %73 = vector.broadcast %72 : vector<64x1xf32> to vector<64x32xf32>
    %74 = arith.mulf %71, %73 : vector<64x32xf32>
    %75 = tpu.concatenate %57, %74 in 1 : vector<64x32xf32>, vector<64x32xf32> -> vector<64x64xf32>
    %76 = arith.truncf %75 : vector<64x64xf32> to vector<64x64xbf16>
    %c0_45 = arith.constant 0 : index
    %c0_46 = arith.constant 0 : index
    %77 = vector.load %arg11[%c0_45, %c0_46] : memref<64x64xbf16, #tpu.memory_space<vmem>>, vector<64x64xbf16>
    tpu.vector_store %arg11[%c0_45, %c0_46], %76 {strides = array<i32>} : memref<64x64xbf16, #tpu.memory_space<vmem>>, vector<64x64xbf16>,
    %c0_47 = arith.constant 0 : index
    %c0_48 = arith.constant 0 : index
    %78 = vector.load %arg11[%c0_47, %c0_48] : memref<64x64xbf16, #tpu.memory_space<vmem>>, vector<64x64xbf16>
    %c0_49 = arith.constant 0 : index
    %c0_50 = arith.constant 0 : index
    %79 = vector.load %arg7[%c0_49, %c0_50] : memref<64x64xbf16, #tpu.memory_space<vmem>>, vector<64x64xbf16>
    %cst_51 = arith.constant dense<0.000000e+00> : vector<64x64xf32>
    %80 = tpu.matmul %78, %79, %cst_51 {dimension_numbers = #tpu.dot_dimension_numbers<[1], [0], [0], [1], [0, 0, 1, 1], [], []>} : vector<64x64xbf16>, vector<64x64xbf16>, vector<64x64xf32> -> vector<64x64xf32>
    %c0_52 = arith.constant 0 : index
    %c0_53 = arith.constant 0 : index
    %81 = vector.load %arg8[%c0_52, %c0_53] : memref<1x64xf32, #tpu.memory_space<vmem>>, vector<1x64xf32>
    %82 = vector.broadcast %81 : vector<1x64xf32> to vector<64x64xf32>
    %83 = arith.addf %80, %82 : vector<64x64xf32>
    %c0_54 = arith.constant 0 : index
    %c0_55 = arith.constant 0 : index
    %84 = vector.load %arg1[%c0_54, %c0_55] : memref<64x64xf32, #tpu.memory_space<vmem>>, vector<64x64xf32>
    %85 = arith.addf %84, %83 : vector<64x64xf32>
    %c0_56 = arith.constant 0 : index
    %c0_57 = arith.constant 0 : index
    %86 = vector.load %arg9[%c0_56, %c0_57] : memref<64x64xf32, #tpu.memory_space<vmem>>, vector<64x64xf32>
    tpu.vector_store %arg9[%c0_56, %c0_57], %85 {strides = array<i32>} : memref<64x64xf32, #tpu.memory_space<vmem>>, vector<64x64xf32>,
    return
  }
  func.func @transform_0(%arg0: i32) -> (i32, i32) {
    %c0_i32 = arith.constant 0 : i32
    %c0_i32_0 = arith.constant 0 : i32
    return %arg0, %c0_i32 : i32, i32
  }
  func.func @transform_1(%arg0: i32) -> (i32, i32) {
    %c0_i32 = arith.constant 0 : i32
    %c0_i32_0 = arith.constant 0 : i32
    %c0_i32_1 = arith.constant 0 : i32
    return %c0_i32, %c0_i32_0 : i32, i32
  }
  func.func @transform_2(%arg0: i32) -> (i32, i32) {
    %c0_i32 = arith.constant 0 : i32
    %c0_i32_0 = arith.constant 0 : i32
    %c0_i32_1 = arith.constant 0 : i32
    return %c0_i32, %c0_i32_0 : i32, i32
  }
  func.func @transform_3(%arg0: i32) -> (i32, i32) {
    %c0_i32 = arith.constant 0 : i32
    %c0_i32_0 = arith.constant 0 : i32
    %c0_i32_1 = arith.constant 0 : i32
    return %c0_i32, %c0_i32_0 : i32, i32
  }
  func.func @transform_4(%arg0: i32) -> (i32, i32) {
    %c0_i32 = arith.constant 0 : i32
    %c0_i32_0 = arith.constant 0 : i32
    %c0_i32_1 = arith.constant 0 : i32
    return %c0_i32, %c0_i32_0 : i32, i32
  }
  func.func @transform_5(%arg0: i32) -> (i32, i32) {
    %c0_i32 = arith.constant 0 : i32
    %c0_i32_0 = arith.constant 0 : i32
    %c0_i32_1 = arith.constant 0 : i32
    return %c0_i32, %c0_i32_0 : i32, i32
  }
  func.func @transform_6(%arg0: i32) -> (i32, i32) {
    %c0_i32 = arith.constant 0 : i32
    %c0_i32_0 = arith.constant 0 : i32
    %c0_i32_1 = arith.constant 0 : i32
    return %c0_i32, %c0_i32_0 : i32, i32
  }
  func.func @transform_7(%arg0: i32) -> (i32, i32) {
    %c0_i32 = arith.constant 0 : i32
    %c0_i32_0 = arith.constant 0 : i32
    %c0_i32_1 = arith.constant 0 : i32
    return %c0_i32, %c0_i32_0 : i32, i32
  }
  func.func @transform_8(%arg0: i32) -> (i32, i32) {
    %c0_i32 = arith.constant 0 : i32
    %c0_i32_0 = arith.constant 0 : i32
    return %arg0, %c0_i32 : i32, i32
  }
}

</mosaic_0001>

<llo_original>
// kernel: tpu_custom_call.1
$region0: #{tpu_custom_call.1}
  #allocation0 [shape = 'u32[]', space=smem, size = 0x4, offset = 0x4, fixed_abs, tag = 'smem constant byte address 0x4 - core index']
  #allocation1 [shape = 'u32[72,128]{1,0:T(1,128)}', space=vmem, size = 0x9000, scoped, tag = 'internal scratch']
  #allocation2 [shape = 'bf16[64,64]{1,0:T(8,128)(2,1)}', space=vmem, size = 0x4000, scoped, tag = 'scratch operand']
  #allocation3 [shape = 'bf16[64,64]{1,0:T(8,128)(2,1)}', space=vmem, size = 0x4000, scoped, tag = 'scratch operand']
  #allocation4 [shape = 'bf16[64,192]{1,0:T(8,128)(2,1)}', space=vmem, size = 0x8000, scoped, tag = 'scratch operand']
  %s0 = inlined_call_operand.vmem [shape: f32[128,64], index: 0, kind: input, shape index: {}]
  %s1 = inlined_call_operand.vmem [shape: f32[1,64], index: 1, kind: input, shape index: {}]
  %s2 = inlined_call_operand.vmem [shape: f32[1,64], index: 2, kind: input, shape index: {}]
  %s3 = inlined_call_operand.vmem [shape: f32[64,32], index: 3, kind: input, shape index: {}]
  %s4 = inlined_call_operand.vmem [shape: bf16[64,192], index: 4, kind: input, shape index: {}]
  %s5 = inlined_call_operand.vmem [shape: f32[1,192], index: 5, kind: input, shape index: {}]
  %s6 = inlined_call_operand.vmem [shape: bf16[64,64], index: 6, kind: input, shape index: {}]
  %s7 = inlined_call_operand.vmem [shape: f32[1,64], index: 7, kind: input, shape index: {}]
  %s8 = inlined_call_operand.vmem [shape: f32[128,64], index: 8, kind: output, shape index: {}]
  %s9 = sld [smem:[#allocation0]]
  $region65: #{tpu_custom_call.1} parent=0
    _
  %s11 = ssub.s32 1, %s9
  %s12 = scalar_select 0, %s11, %s9
  loop: start=0, step=1, limit=4
  $region2: #{tpu_custom_call.1} parent=0 // loop_pre_header
    _
  $region3: #{tpu_custom_call.1} parent=0 // loop_header
    %s14 = sphi 0, %s18
    %p15 = scmp.ge.s32.totalorder %s14, 4
    %s24 = sphi 0, %s26
    %s27 = sphi 0, %s24
    %s28 = sphi 0, %s27
    %s44 = sphi 0, %s28
    %s48 = sphi 0, %s48
    %s50 = sphi 0, %s48
    %s51 = sphi 0, %s50
    %s65 = sphi 0, %s51
    %s69 = sphi 0, %s69
    %s71 = sphi 0, %s69
    %s72 = sphi 0, %s71
    %s86 = sphi 0, %s72
    %s90 = sphi 0, %s90
    %s92 = sphi 0, %s90
    %s93 = sphi 0, %s92
    %s107 = sphi 0, %s93
    %s111 = sphi 0, %s111
    %s113 = sphi 0, %s111
    %s114 = sphi 0, %s113
    %s128 = sphi 0, %s114
    %s132 = sphi 0, %s132
    %s134 = sphi 0, %s132
    %s135 = sphi 0, %s134
    %s149 = sphi 0, %s135
    %s153 = sphi 0, %s153
    %s155 = sphi 0, %s153
    %s156 = sphi 0, %s155
    %s170 = sphi 0, %s156
    %s174 = sphi 0, %s174
    %s176 = sphi 0, %s174
    %s177 = sphi 0, %s176
    %s191 = sphi 0, %s177
    %s197 = sphi 0, %s199
    %s200 = sphi 0, %s197
    %s201 = sphi 0, %s200
    %s217 = sphi 0, %s201
  $region4: #{tpu_custom_call.1} parent=0 // loop_header_branch
    %17 = sbr.rel (%p15) target = $region8
  $region5: #{tpu_custom_call.1} parent=0 // loop_body
    %s19 = ssub.s32 %s14, 1
    %s20 = ssub.s32 %s14, 2
    %s21 = sadd.s32 %s14, 1
    %s22 = ssub.s32 %s14, %s21
    %p23 = scmp.eq.s32.totalorder %s22, 0
    %s25 = sadd.s32 %s24, 1
    %s26 = scalar_select %p23, %s24, %s25
    %p29 = pneg %p23
    %p30 = scmp.eq.s32.totalorder %s14, 1
    %p31 = por %p29, %p30
    %p32 = scmp.ne.s32.totalorder %s24, %s27
    %p33 = scmp.eq.s32.totalorder %s14, 0
    %p34 = por %p32, %p33
    %p35 = scmp.ne.s32.totalorder %s24, %s27
    %p36 = scmp.eq.s32.totalorder %s19, 1
    %p37 = por %p35, %p36
    %p38 = scmp.ne.s32.totalorder %s27, %s28
    %p39 = scmp.eq.s32.totalorder %s19, 0
    %p40 = por %p38, %p39
    %p41 = scmp.ne.s32.totalorder %s27, %s28
    %p42 = scmp.eq.s32.totalorder %s20, 1
    %p43 = por %p41, %p42
    %p45 = scmp.ne.s32.totalorder %s28, %s44
    %p46 = scmp.eq.s32.totalorder %s20, 0
    %p47 = por %p45, %p46
    %s49 = sadd.s32 %s48, 1
    %p52 = scmp.eq.s32.totalorder %s14, 1
    %p53 = scmp.ne.s32.totalorder %s48, %s50
    %p54 = scmp.eq.s32.totalorder %s14, 0
    %p55 = por %p53, %p54
    %p56 = scmp.ne.s32.totalorder %s48, %s50
    %p57 = scmp.eq.s32.totalorder %s19, 1
    %p58 = por %p56, %p57
    %p59 = scmp.ne.s32.totalorder %s50, %s51
    %p60 = scmp.eq.s32.totalorder %s19, 0
    %p61 = por %p59, %p60
    %p62 = scmp.ne.s32.totalorder %s50, %s51
    %p63 = scmp.eq.s32.totalorder %s20, 1
    %p64 = por %p62, %p63
    %p66 = scmp.ne.s32.totalorder %s51, %s65
    %p67 = scmp.eq.s32.totalorder %s20, 0
    %p68 = por %p66, %p67
    %s70 = sadd.s32 %s69, 1
    %p73 = scmp.eq.s32.totalorder %s14, 1
    %p74 = scmp.ne.s32.totalorder %s69, %s71
    %p75 = scmp.eq.s32.totalorder %s14, 0
    %p76 = por %p74, %p75
    %p77 = scmp.ne.s32.totalorder %s69, %s71
    %p78 = scmp.eq.s32.totalorder %s19, 1
    %p79 = por %p77, %p78
    %p80 = scmp.ne.s32.totalorder %s71, %s72
    %p81 = scmp.eq.s32.totalorder %s19, 0
    %p82 = por %p80, %p81
    %p83 = scmp.ne.s32.totalorder %s71, %s72
    %p84 = scmp.eq.s32.totalorder %s20, 1
    %p85 = por %p83, %p84
    %p87 = scmp.ne.s32.totalorder %s72, %s86
    %p88 = scmp.eq.s32.totalorder %s20, 0
    %p89 = por %p87, %p88
    %s91 = sadd.s32 %s90, 1
    %p94 = scmp.eq.s32.totalorder %s14, 1
    %p95 = scmp.ne.s32.totalorder %s90, %s92
    %p96 = scmp.eq.s32.totalorder %s14, 0
    %p97 = por %p95, %p96
    %p98 = scmp.ne.s32.totalorder %s90, %s92
    %p99 = scmp.eq.s32.totalorder %s19, 1
    %p100 = por %p98, %p99
    %p101 = scmp.ne.s32.totalorder %s92, %s93
    %p102 = scmp.eq.s32.totalorder %s19, 0
    %p103 = por %p101, %p102
    %p104 = scmp.ne.s32.totalorder %s92, %s93
    %p105 = scmp.eq.s32.totalorder %s20, 1
    %p106 = por %p104, %p105
    %p108 = scmp.ne.s32.totalorder %s93, %s107
    %p109 = scmp.eq.s32.totalorder %s20, 0
    %p110 = por %p108, %p109
    %s112 = sadd.s32 %s111, 1
    %p115 = scmp.eq.s32.totalorder %s14, 1
    %p116 = scmp.ne.s32.totalorder %s111, %s113
    %p117 = scmp.eq.s32.totalorder %s14, 0
    %p118 = por %p116, %p117
    %p119 = scmp.ne.s32.totalorder %s111, %s113
    %p120 = scmp.eq.s32.totalorder %s19, 1
    %p121 = por %p119, %p120
    %p122 = scmp.ne.s32.totalorder %s113, %s114
    %p123 = scmp.eq.s32.totalorder %s19, 0
    %p124 = por %p122, %p123
    %p125 = scmp.ne.s32.totalorder %s113, %s114
    %p126 = scmp.eq.s32.totalorder %s20, 1
    %p127 = por %p125, %p126
    %p129 = scmp.ne.s32.totalorder %s114, %s128
    %p130 = scmp.eq.s32.totalorder %s20, 0
    %p131 = por %p129, %p130
    %s133 = sadd.s32 %s132, 1
    %p136 = scmp.eq.s32.totalorder %s14, 1
    %p137 = scmp.ne.s32.totalorder %s132, %s134
    %p138 = scmp.eq.s32.totalorder %s14, 0
    %p139 = por %p137, %p138
    %p140 = scmp.ne.s32.totalorder %s132, %s134
    %p141 = scmp.eq.s32.totalorder %s19, 1
    %p142 = por %p140, %p141
    %p143 = scmp.ne.s32.totalorder %s134, %s135
    %p144 = scmp.eq.s32.totalorder %s19, 0
    %p145 = por %p143, %p144
    %p146 = scmp.ne.s32.totalorder %s134, %s135
    %p147 = scmp.eq.s32.totalorder %s20, 1
    %p148 = por %p146, %p147
    %p150 = scmp.ne.s32.totalorder %s135, %s149
    %p151 = scmp.eq.s32.totalorder %s20, 0
    %p152 = por %p150, %p151
    %s154 = sadd.s32 %s153, 1
    %p157 = scmp.eq.s32.totalorder %s14, 1
    %p158 = scmp.ne.s32.totalorder %s153, %s155
    %p159 = scmp.eq.s32.totalorder %s14, 0
    %p160 = por %p158, %p159
    %p161 = scmp.ne.s32.totalorder %s153, %s155
    %p162 = scmp.eq.s32.totalorder %s19, 1
    %p163 = por %p161, %p162
    %p164 = scmp.ne.s32.totalorder %s155, %s156
    %p165 = scmp.eq.s32.totalorder %s19, 0
    %p166 = por %p164, %p165
    %p167 = scmp.ne.s32.totalorder %s155, %s156
    %p168 = scmp.eq.s32.totalorder %s20, 1
    %p169 = por %p167, %p168
    %p171 = scmp.ne.s32.totalorder %s156, %s170
    %p172 = scmp.eq.s32.totalorder %s20, 0
    %p173 = por %p171, %p172
    %s175 = sadd.s32 %s174, 1
    %p178 = scmp.eq.s32.totalorder %s14, 1
    %p179 = scmp.ne.s32.totalorder %s174, %s176
    %p180 = scmp.eq.s32.totalorder %s14, 0
    %p181 = por %p179, %p180
    %p182 = scmp.ne.s32.totalorder %s174, %s176
    %p183 = scmp.eq.s32.totalorder %s19, 1
    %p184 = por %p182, %p183
    %p185 = scmp.ne.s32.totalorder %s176, %s177
    %p186 = scmp.eq.s32.totalorder %s19, 0
    %p187 = por %p185, %p186
    %p188 = scmp.ne.s32.totalorder %s176, %s177
    %p189 = scmp.eq.s32.totalorder %s20, 1
    %p190 = por %p188, %p189
    %p192 = scmp.ne.s32.totalorder %s177, %s191
    %p193 = scmp.eq.s32.totalorder %s20, 0
    %p194 = por %p192, %p193
    %s195 = ssub.s32 %s14, %s21
    %p196 = scmp.eq.s32.totalorder %s195, 0
    %s198 = sadd.s32 %s197, 1
    %s199 = scalar_select %p196, %s197, %s198
    %p202 = pneg %p196
    %p203 = scmp.eq.s32.totalorder %s14, 1
    %p204 = por %p202, %p203
    %p205 = scmp.ne.s32.totalorder %s197, %s200
    %p206 = scmp.eq.s32.totalorder %s14, 0
    %p207 = por %p205, %p206
    %p208 = scmp.ne.s32.totalorder %s197, %s200
    %p209 = scmp.eq.s32.totalorder %s19, 1
    %p210 = por %p208, %p209
    %p211 = scmp.ne.s32.totalorder %s200, %s201
    %p212 = scmp.eq.s32.totalorder %s19, 0
    %p213 = por %p211, %p212
    %p214 = scmp.ne.s32.totalorder %s200, %s201
    %p215 = scmp.eq.s32.totalorder %s20, 1
    %p216 = por %p214, %p215
    %p218 = scmp.ne.s32.totalorder %s201, %s217
    %p219 = scmp.eq.s32.totalorder %s20, 0
    %p220 = por %p218, %p219
    %p221 = scmp.le.s32.totalorder 1, %s14
    %p222 = scmp.lt.s32.totalorder %s14, 3
    %p223 = pnand %p221, %p222
    %p224 = pneg %p223
    // Predicated region
    $region9: #{tpu_custom_call.1} parent=5 // pred_check
      _
    $region10: #{tpu_custom_call.1} parent=5 // pred_check_branch
      %226 = sbr.rel (%p223) target = $region12
    $region11: #{tpu_custom_call.1} parent=5 // pred_region
      %s227 = ssub.s32 %s14, 1
      // Predicated region
      $region13: #{tpu_custom_call.1} parent=11 // pred_check
        %p228 = pneg %p61
      $region14: #{tpu_custom_call.1} parent=11 // pred_check_branch
        %230 = sbr.rel (%p228) target = $region16
      $region15: #{tpu_custom_call.1} parent=11 // pred_region
        _
      $region16: #{tpu_custom_call.1} parent=11 // pred_fallthru
        _
      // Predicated region
      $region17: #{tpu_custom_call.1} parent=11 // pred_check
        %p231 = pneg %p82
      $region18: #{tpu_custom_call.1} parent=11 // pred_check_branch
        %233 = sbr.rel (%p231) target = $region20
      $region19: #{tpu_custom_call.1} parent=11 // pred_region
        _
      $region20: #{tpu_custom_call.1} parent=11 // pred_fallthru
        _
      // Predicated region
      $region21: #{tpu_custom_call.1} parent=11 // pred_check
        %p234 = pneg %p103
      $region22: #{tpu_custom_call.1} parent=11 // pred_check_branch
        %236 = sbr.rel (%p234) target = $region24
      $region23: #{tpu_custom_call.1} parent=11 // pred_region
        _
      $region24: #{tpu_custom_call.1} parent=11 // pred_fallthru
        _
      // Predicated region
      $region25: #{tpu_custom_call.1} parent=11 // pred_check
        %p237 = pneg %p124
      $region26: #{tpu_custom_call.1} parent=11 // pred_check_branch
        %239 = sbr.rel (%p237) target = $region28
      $region27: #{tpu_custom_call.1} parent=11 // pred_region
        _
      $region28: #{tpu_custom_call.1} parent=11 // pred_fallthru
        _
      // Predicated region
      $region29: #{tpu_custom_call.1} parent=11 // pred_check
        %p240 = pneg %p145
      $region30: #{tpu_custom_call.1} parent=11 // pred_check_branch
        %242 = sbr.rel (%p240) target = $region32
      $region31: #{tpu_custom_call.1} parent=11 // pred_region
        _
      $region32: #{tpu_custom_call.1} parent=11 // pred_fallthru
        _
      // Predicated region
      $region33: #{tpu_custom_call.1} parent=11 // pred_check
        %p243 = pneg %p166
      $region34: #{tpu_custom_call.1} parent=11 // pred_check_branch
        %245 = sbr.rel (%p243) target = $region36
      $region35: #{tpu_custom_call.1} parent=11 // pred_region
        _
      $region36: #{tpu_custom_call.1} parent=11 // pred_fallthru
        _
      // Predicated region
      $region37: #{tpu_custom_call.1} parent=11 // pred_check
        %p246 = pneg %p187
      $region38: #{tpu_custom_call.1} parent=11 // pred_check_branch
        %248 = sbr.rel (%p246) target = $region40
      $region39: #{tpu_custom_call.1} parent=11 // pred_region
        _
      $region40: #{tpu_custom_call.1} parent=11 // pred_fallthru
        _
    $region12: #{tpu_custom_call.1} parent=5 // pred_fallthru
      _
    %p249 = scmp.lt.s32.totalorder %s14, 2
    // Predicated region
    $region41: #{tpu_custom_call.1} parent=5 // pred_check
      %p250 = pneg %p249
    $region42: #{tpu_custom_call.1} parent=5 // pred_check_branch
      %252 = sbr.rel (%p250) target = $region44
    $region43: #{tpu_custom_call.1} parent=5 // pred_region
      // Predicated region
      $region45: #{tpu_custom_call.1} parent=43 // pred_check
        %p253 = pneg %p34
      $region46: #{tpu_custom_call.1} parent=43 // pred_check_branch
        %255 = sbr.rel (%p253) target = $region48
      $region47: #{tpu_custom_call.1} parent=43 // pred_region
        %s256 = smul.u32 8, %s14
        %p257 = scmp.lt.s32.totalorder %s256, 15
        %s258 = scalar_select %p257, %s256, 15
        %s259 = smul.addr %s258, 8
        %s260 = scalar_lea.vmem %s0, %s259
        %s261 = smul.u32 8, %s14
      $region48: #{tpu_custom_call.1} parent=43 // pred_fallthru
        _
    $region44: #{tpu_custom_call.1} parent=5 // pred_fallthru
      _
    %p262 = scmp.le.s32.totalorder 1, %s14
    %p263 = scmp.lt.s32.totalorder %s14, 3
    %p264 = pnand %p262, %p263
    %p265 = pneg %p264
    // Predicated region
    $region49: #{tpu_custom_call.1} parent=5 // pred_check
      _
    $region50: #{tpu_custom_call.1} parent=5 // pred_check_branch
      %267 = sbr.rel (%p264) target = $region52
    $region51: #{tpu_custom_call.1} parent=5 // pred_region
      %s268 = ssub.s32 %s14, 1
      %s269 = smul.u32 8, %s19
      %p270 = scmp.lt.s32.totalorder %s269, 15
      %s271 = scalar_select %p270, %s269, 15
      %s272 = smul.addr %s271, 8
      %s273 = scalar_lea.vmem %s0, %s272
      %p274 = pneg %p40
      %p275 = pneg %p37
      %p276 = pneg %p61
      %p277 = pneg %p58
      %p278 = pneg %p82
      %p279 = pneg %p79
      %p280 = pneg %p103
      %p281 = pneg %p100
      %p282 = pneg %p124
      %p283 = pneg %p121
      %p284 = pneg %p145
      %p285 = pneg %p142
      %p286 = pneg %p166
      %p287 = pneg %p163
      %p288 = pneg %p187
      %p289 = pneg %p184
      %p290 = pneg %p213
      %p291 = pneg %p210
      %s292 = smul.u32 8, %s19
      %p293 = scmp.lt.s32.totalorder %s292, 15
      %s294 = scalar_select %p293, %s292, 15
      %s295 = smul.addr %s294, 8
      %s296 = scalar_lea.vmem %s8, %s295
      %s297 = smul.u32 8, %s19
      %p298 = scmp.lt.s32.totalorder %s297, 15
      %s299 = scalar_select %p298, %s297, 15
      %s300 = smul.addr %s299, 8
      %s301 = scalar_lea.vmem %s0, %s300
      %s302 = smul.u32 8, %s19
      %s303 = smul.u32 8, %s19
      %p304 = scmp.lt.s32.totalorder %s303, 15
      %s305 = scalar_select %p304, %s303, 15
      %s306 = smul.addr %s305, 8
      %s307 = scalar_lea.vmem %s8, %s306
      %s308 = smul.u32 8, %s19
      %v310 = vld [vmem:[%s1] sm:$0x1]
      %v311 = vld [vmem:[%s2] sm:$0x1]
      %v312 = vld [vmem:[%s3] sm:$0xff]
      %v313 = vld [vmem:[%s3 + $0x8] sm:$0xff]
      %v314 = vld [vmem:[%s3 + $0x10] sm:$0xff]
      %v315 = vld [vmem:[%s3 + $0x18] sm:$0xff]
      %v316 = vld [vmem:[%s3 + $0x20] sm:$0xff]
      %v317 = vld [vmem:[%s3 + $0x28] sm:$0xff]
      %v318 = vld [vmem:[%s3 + $0x30] sm:$0xff]
      %v319 = vld [vmem:[%s3 + $0x38] sm:$0xff]
      %v320 = vld [vmem:[%s301] sm:$0xff]
      %v321 = vld [vmem:[%s301 + $0x8] sm:$0xff]
      %v322 = vld [vmem:[%s301 + $0x10] sm:$0xff]
      %v323 = vld [vmem:[%s301 + $0x18] sm:$0xff]
      %v324 = vld [vmem:[%s301 + $0x20] sm:$0xff]
      %v325 = vld [vmem:[%s301 + $0x28] sm:$0xff]
      %v326 = vld [vmem:[%s301 + $0x30] sm:$0xff]
      %v327 = vld [vmem:[%s301 + $0x38] sm:$0xff]
      %vm328 = vcmask 523264
      %v329 = vsel %vm328, %v320, 0.0
      %v330 = vsel %vm328, %v321, 0.0
      %v331 = vadd.f32 %v329, %v330
      %v332 = vsel %vm328, %v322, 0.0
      %v333 = vadd.f32 %v331, %v332
      %v334 = vsel %vm328, %v323, 0.0
      %v335 = vadd.f32 %v333, %v334
      %v336 = vsel %vm328, %v324, 0.0
      %v337 = vadd.f32 %v335, %v336
      %v338 = vsel %vm328, %v325, 0.0
      %v339 = vadd.f32 %v337, %v338
      %v340 = vsel %vm328, %v326, 0.0
      %v341 = vadd.f32 %v339, %v340
      %v342 = vsel %vm328, %v327, 0.0
      %v343 = vadd.f32 %v341, %v342
      %v344 = vrot.slane %v343, 4
      %v345 = vadd.f32 %v343, %v344
      %v346 = vrot.slane %v345, 2
      %v347 = vadd.f32 %v345, %v346
      %v348 = vrot.slane %v347, 1
      %v349 = vadd.f32 %v347, %v348
      %v351 = vsel %vm328, %v349, 0
      %353 = vmatpush.msra.mxu0 0.0
      %354 = vmatpush.msra.mxu0 0.0
      %355 = vmatpush.msra.mxu0 0.0
      %356 = vmatpush.msra.mxu0 0.0
      %357 = vmatpush.msra.mxu0 0.0
      %358 = vmatpush.msra.mxu0 0.0
      %359 = vmatpush.msra.mxu0 0.0
      %360 = vmatpush.msra.mxu0 0.0
      %361 = vmatpush.msra.mxu0 %v319
      %362 = vmatpush.msra.mxu0 %v318
      %363 = vmatpush.msra.mxu0 %v317
      %364 = vmatpush.msra.mxu0 %v316
      %365 = vmatpush.msra.mxu0 %v315
      %366 = vmatpush.msra.mxu0 %v314
      %367 = vmatpush.msra.mxu0 %v313
      %368 = vmatpush.msra.mxu0 %v312
      %369 = vmatmul.f32.gmra.mxu0 %v351
      %v370 = vpop.f32.mrf.mxu0
      %v371 = vadd.f32 0.0, %v370
      %372 = vdwg.mxu0
      %v373 = vmul.f32 %v371, 0.0078125
      %vm374 = vcmask 261120
      %v376 = vsel %vm374, %v373, 0
      %v379 = vsel %vm374, %v312, 0
      %v382 = vsel %vm374, %v313, 0
      %v385 = vsel %vm374, %v314, 0
      %v388 = vsel %vm374, %v315, 0
      %v391 = vsel %vm374, %v316, 0
      %v394 = vsel %vm374, %v317, 0
      %v397 = vsel %vm374, %v318, 0
      %v400 = vsel %vm374, %v319, 0
      %402 = vmatpush.xpose.msra.mxu0 0.0
      %403 = vmatpush.xpose.msra.mxu0 0.0
      %404 = vmatpush.xpose.msra.mxu0 0.0
      %405 = vmatpush.xpose.msra.mxu0 0.0
      %406 = vmatpush.xpose.msra.mxu0 0.0
      %407 = vmatpush.xpose.msra.mxu0 0.0
      %408 = vmatpush.xpose.msra.mxu0 0.0
      %409 = vmatpush.xpose.msra.mxu0 0.0
      %410 = vmatpush.xpose.msra.mxu0 %v400
      %411 = vmatpush.xpose.msra.mxu0 %v397
      %412 = vmatpush.xpose.msra.mxu0 %v394
      %413 = vmatpush.xpose.msra.mxu0 %v391
      %414 = vmatpush.xpose.msra.mxu0 %v388
      %415 = vmatpush.xpose.msra.mxu0 %v385
      %416 = vmatpush.xpose.msra.mxu0 %v382
      %417 = vmatpush.xpose.msra.mxu0 %v379
      %418 = vmatmul.f32.gmra.mxu0 %v376
      %v419 = vpop.f32.mrf.mxu0
      %v420 = vadd.f32 0.0, %v419
      %421 = vdwg.mxu0
      %v422 = vperm.slane %v420, 0
      %v423 = vsub.f32 %v320, %v422
      %v424 = vsub.f32 %v321, %v422
      %v425 = vsub.f32 %v322, %v422
      %v426 = vsub.f32 %v323, %v422
      %v427 = vsub.f32 %v324, %v422
      %v428 = vsub.f32 %v325, %v422
      %v429 = vsub.f32 %v326, %v422
      %v430 = vsub.f32 %v327, %v422
      %v431 = vmul.f32 %v423, %v423
      %v432 = vmul.f32 %v424, %v424
      %v433 = vmul.f32 %v425, %v425
      %v434 = vmul.f32 %v426, %v426
      %v435 = vmul.f32 %v427, %v427
      %v436 = vmul.f32 %v428, %v428
      %v437 = vmul.f32 %v429, %v429
      %v438 = vmul.f32 %v430, %v430
      %v439 = vsel %vm328, %v431, 0.0
      %v440 = vsel %vm328, %v432, 0.0
      %v441 = vadd.f32 %v439, %v440
      %v442 = vsel %vm328, %v433, 0.0
      %v443 = vadd.f32 %v441, %v442
      %v444 = vsel %vm328, %v434, 0.0
      %v445 = vadd.f32 %v443, %v444
      %v446 = vsel %vm328, %v435, 0.0
      %v447 = vadd.f32 %v445, %v446
      %v448 = vsel %vm328, %v436, 0.0
      %v449 = vadd.f32 %v447, %v448
      %v450 = vsel %vm328, %v437, 0.0
      %v451 = vadd.f32 %v449, %v450
      %v452 = vsel %vm328, %v438, 0.0
      %v453 = vadd.f32 %v451, %v452
      %v454 = vrot.slane %v453, 4
      %v455 = vadd.f32 %v453, %v454
      %v456 = vrot.slane %v455, 2
      %v457 = vadd.f32 %v455, %v456
      %v458 = vrot.slane %v457, 1
      %v459 = vadd.f32 %v457, %v458
      %v461 = vsel %vm328, %v459, 0
      %463 = vmatpush.msra.mxu0 0.0
      %464 = vmatpush.msra.mxu0 0.0
      %465 = vmatpush.msra.mxu0 0.0
      %466 = vmatpush.msra.mxu0 0.0
      %467 = vmatpush.msra.mxu0 0.0
      %468 = vmatpush.msra.mxu0 0.0
      %469 = vmatpush.msra.mxu0 0.0
      %470 = vmatpush.msra.mxu0 0.0
      %471 = vmatpush.msra.mxu0 %v319
      %472 = vmatpush.msra.mxu0 %v318
      %473 = vmatpush.msra.mxu0 %v317
      %474 = vmatpush.msra.mxu0 %v316
      %475 = vmatpush.msra.mxu0 %v315
      %476 = vmatpush.msra.mxu0 %v314
      %477 = vmatpush.msra.mxu0 %v313
      %478 = vmatpush.msra.mxu0 %v312
      %479 = vmatmul.f32.gmra.mxu0 %v461
      %v480 = vpop.f32.mrf.mxu0
      %v481 = vadd.f32 0.0, %v480
      %482 = vdwg.mxu0
      %v483 = vmul.f32 %v481, 0.0078125
      %v484 = vadd.f32 %v483, 1e-05
      %v485 = vrsqrt.pop %v484
      %v486 = vmul.f32 %v485, %v484
      %v487 = vmul.f32 %v486, %v485
      %v488 = vmul.f32 0.5, %v487
      %v489 = vsub.f32 1.5, %v488
      %v490 = vmul.f32 %v485, %v489
      %vm491 = vweird.f32 %v484
      %vm492 = vweird.f32 %v485
      %vm493 = vmor %vm491, %vm492
      %v494 = vsel %vm493, %v485, %v490
      %v496 = vsel %vm374, %v494, 0
      %498 = vmatpush.xpose.msra.mxu0 0.0
      %499 = vmatpush.xpose.msra.mxu0 0.0
      %500 = vmatpush.xpose.msra.mxu0 0.0
      %501 = vmatpush.xpose.msra.mxu0 0.0
      %502 = vmatpush.xpose.msra.mxu0 0.0
      %503 = vmatpush.xpose.msra.mxu0 0.0
      %504 = vmatpush.xpose.msra.mxu0 0.0
      %505 = vmatpush.xpose.msra.mxu0 0.0
      %506 = vmatpush.xpose.msra.mxu0 %v400
      %507 = vmatpush.xpose.msra.mxu0 %v397
      %508 = vmatpush.xpose.msra.mxu0 %v394
      %509 = vmatpush.xpose.msra.mxu0 %v391
      %510 = vmatpush.xpose.msra.mxu0 %v388
      %511 = vmatpush.xpose.msra.mxu0 %v385
      %512 = vmatpush.xpose.msra.mxu0 %v382
      %513 = vmatpush.xpose.msra.mxu0 %v379
      %514 = vmatmul.f32.gmra.mxu0 %v496
      %v515 = vpop.f32.mrf.mxu0
      %v516 = vadd.f32 0.0, %v515
      %517 = vdwg.mxu0
      %v518 = vmul.f32 %v516, %v310
      %v519 = vmul.f32 %v420, %v518
      %v520 = vsub.f32 %v311, %v519
      %v521 = vperm.slane %v518, 0
      %v522 = vmul.f32 %v320, %v521
      %v523 = vmul.f32 %v321, %v521
      %v524 = vmul.f32 %v322, %v521
      %v525 = vmul.f32 %v323, %v521
      %v526 = vmul.f32 %v324, %v521
      %v527 = vmul.f32 %v325, %v521
      %v528 = vmul.f32 %v326, %v521
      %v529 = vmul.f32 %v327, %v521
      %v531 = vperm.slane %v520, 0
      %v533 = vadd.f32 %v522, %v531
      %v534 = vadd.f32 %v523, %v531
      %v535 = vadd.f32 %v524, %v531
      %v536 = vadd.f32 %v525, %v531
      %v537 = vadd.f32 %v526, %v531
      %v538 = vadd.f32 %v527, %v531
      %v539 = vadd.f32 %v528, %v531
      %v540 = vadd.f32 %v529, %v531
      %v541 = vpack.c.bf16 %v533, %v533
      %v542 = vpack.c.bf16 %v534, %v534
      %v543 = vpack.c.bf16 %v535, %v535
      %v544 = vpack.c.bf16 %v536, %v536
      %v545 = vpack.c.bf16 %v537, %v537
      %v546 = vpack.c.bf16 %v538, %v538
      %v547 = vpack.c.bf16 %v539, %v539
      %v548 = vpack.c.bf16 %v540, %v540
      %vm549 = vcmask 519168
      %550 = vst.msk [vmem:[#allocation2] sm:$0xf] %vm549, %v541
      %551 = vst.msk [vmem:[#allocation2 + $0x4] sm:$0xf] %vm549, %v542
      %552 = vst.msk [vmem:[#allocation2 + $0x8] sm:$0xf] %vm549, %v543
      %553 = vst.msk [vmem:[#allocation2 + $0xc] sm:$0xf] %vm549, %v544
      %554 = vst.msk [vmem:[#allocation2 + $0x10] sm:$0xf] %vm549, %v545
      %555 = vst.msk [vmem:[#allocation2 + $0x14] sm:$0xf] %vm549, %v546
      %556 = vst.msk [vmem:[#allocation2 + $0x18] sm:$0xf] %vm549, %v547
      %557 = vst.msk [vmem:[#allocation2 + $0x1c] sm:$0xf] %vm549, %v548
      %v558 = vld [vmem:[#allocation2] sm:$0xf]
      %v559 = vld [vmem:[#allocation2 + $0x4] sm:$0xf]
      %v560 = vld [vmem:[#allocation2 + $0x8] sm:$0xf]
      %v561 = vld [vmem:[#allocation2 + $0xc] sm:$0xf]
      %v562 = vld [vmem:[#allocation2 + $0x10] sm:$0xf]
      %v563 = vld [vmem:[#allocation2 + $0x14] sm:$0xf]
      %v564 = vld [vmem:[#allocation2 + $0x18] sm:$0xf]
      %v565 = vld [vmem:[#allocation2 + $0x1c] sm:$0xf]
      %v566 = vld [vmem:[%s4] sm:$0xff]
      %v567 = vld [vmem:[%s4 + $0x8] sm:$0xff]
      %v568 = vld [vmem:[%s4 + $0x10] sm:$0xff]
      %v569 = vld [vmem:[%s4 + $0x18] sm:$0xff]
      %v570 = vld [vmem:[%s4 + $0x20] sm:$0xff]
      %v571 = vld [vmem:[%s4 + $0x28] sm:$0xff]
      %v572 = vld [vmem:[%s4 + $0x30] sm:$0xff]
      %v573 = vld [vmem:[%s4 + $0x38] sm:$0xff]
      %v574 = vld [vmem:[%s5] sm:$0x3]
      %v576 = vperm.slane %v574, 0
      %v577 = vperm.slane %v574, 1
      %v588 = vunpack.c.l.b16 %v558
      %v589 = vunpack.c.l.b16 %v559
      %v590 = vunpack.c.l.b16 %v560
      %v591 = vunpack.c.l.b16 %v561
      %v592 = vunpack.c.l.b16 %v562
      %v593 = vunpack.c.l.b16 %v563
      %v594 = vunpack.c.l.b16 %v564
      %v595 = vunpack.c.l.b16 %v565
      %v596 = vpack.c.b16 %v589, %v588
      %v597 = vpack.c.b16 %v591, %v590
      %v598 = vpack.c.b16 %v593, %v592
      %v599 = vpack.c.b16 %v595, %v594
      %v608 = vunpack.c.l.b16 %v566
      %v609 = vunpack.c.h.b16 %v566
      %v610 = vunpack.c.l.b16 %v567
      %v611 = vunpack.c.h.b16 %v567
      %v612 = vunpack.c.l.b16 %v568
      %v613 = vunpack.c.h.b16 %v568
      %v614 = vunpack.c.l.b16 %v569
      %v615 = vunpack.c.h.b16 %v569
      %v616 = vunpack.c.l.b16 %v570
      %v617 = vunpack.c.h.b16 %v570
      %v618 = vunpack.c.l.b16 %v571
      %v619 = vunpack.c.h.b16 %v571
      %v620 = vunpack.c.l.b16 %v572
      %v621 = vunpack.c.h.b16 %v572
      %v622 = vunpack.c.l.b16 %v573
      %v623 = vunpack.c.h.b16 %v573
      %v624 = vpack.c.b16 %v610, %v608
      %v625 = vpack.c.b16 %v611, %v609
      %v626 = vpack.c.b16 %v614, %v612
      %v627 = vpack.c.b16 %v615, %v613
      %v628 = vpack.c.b16 %v618, %v616
      %v629 = vpack.c.b16 %v619, %v617
      %v630 = vpack.c.b16 %v622, %v620
      %v631 = vpack.c.b16 %v623, %v621
      %v641 = vsel %vm328, %v596, 0
      %v644 = vsel %vm328, %v597, 0
      %v647 = vsel %vm328, %v598, 0
      %v650 = vsel %vm328, %v599, 0
      %652 = vmatpush.bf16.msra.mxu0 0
      %653 = vmatpush.bf16.msra.mxu0 0
      %654 = vmatpush.bf16.msra.mxu0 0
      %655 = vmatpush.bf16.msra.mxu0 0
      %656 = vmatpush.bf16.msra.mxu0 %v630
      %657 = vmatpush.bf16.msra.mxu0 %v628
      %658 = vmatpush.bf16.msra.mxu0 %v626
      %659 = vmatpush.bf16.msra.mxu0 %v624
      %660 = vmatmul.bf16.gmra.mxu0 %v641
      %v661 = vpop.f32.mrf.mxu0
      %v662 = vadd.f32 %v576, %v661
      %v663 = vpop.f32.mrf.mxu0
      %v664 = vadd.f32 %v576, %v663
      %665 = vmatmul.bf16.gmra.mxu0 %v644
      %v666 = vpop.f32.mrf.mxu0
      %v667 = vadd.f32 %v576, %v666
      %v668 = vpop.f32.mrf.mxu0
      %v669 = vadd.f32 %v576, %v668
      %670 = vmatmul.bf16.gmra.mxu0 %v647
      %v671 = vpop.f32.mrf.mxu0
      %v672 = vadd.f32 %v576, %v671
      %v673 = vpop.f32.mrf.mxu0
      %v674 = vadd.f32 %v576, %v673
      %675 = vmatmul.bf16.gmra.mxu0 %v650
      %v676 = vpop.f32.mrf.mxu0
      %v677 = vadd.f32 %v576, %v676
      %v678 = vpop.f32.mrf.mxu0
      %v679 = vadd.f32 %v576, %v678
      %680 = vdwg.mxu0
      %681 = vmatpush.bf16.msra.mxu0 0
      %682 = vmatpush.bf16.msra.mxu0 0
      %683 = vmatpush.bf16.msra.mxu0 0
      %684 = vmatpush.bf16.msra.mxu0 0
      %685 = vmatpush.bf16.msra.mxu0 %v631
      %686 = vmatpush.bf16.msra.mxu0 %v629
      %687 = vmatpush.bf16.msra.mxu0 %v627
      %688 = vmatpush.bf16.msra.mxu0 %v625
      %689 = vmatmul.bf16.gmra.mxu0 %v641
      %v690 = vpop.f32.mrf.mxu0
      %v691 = vadd.f32 %v577, %v690
      %v692 = vpop.f32.mrf.mxu0
      %v693 = vadd.f32 %v577, %v692
      %694 = vmatmul.bf16.gmra.mxu0 %v644
      %v695 = vpop.f32.mrf.mxu0
      %v696 = vadd.f32 %v577, %v695
      %v697 = vpop.f32.mrf.mxu0
      %v698 = vadd.f32 %v577, %v697
      %699 = vmatmul.bf16.gmra.mxu0 %v647
      %v700 = vpop.f32.mrf.mxu0
      %v701 = vadd.f32 %v577, %v700
      %v702 = vpop.f32.mrf.mxu0
      %v703 = vadd.f32 %v577, %v702
      %704 = vmatmul.bf16.gmra.mxu0 %v650
      %v705 = vpop.f32.mrf.mxu0
      %v706 = vadd.f32 %v577, %v705
      %v707 = vpop.f32.mrf.mxu0
      %v708 = vadd.f32 %v577, %v707
      %709 = vdwg.mxu0
      %v710 = vpack.c.bf16 %v691, %v662
      %v711 = vpack.c.bf16 %v693, %v664
      %v712 = vpack.c.bf16 %v696, %v667
      %v713 = vpack.c.bf16 %v698, %v669
      %v714 = vpack.c.bf16 %v701, %v672
      %v715 = vpack.c.bf16 %v703, %v674
      %v716 = vpack.c.bf16 %v706, %v677
      %v717 = vpack.c.bf16 %v708, %v679
      %vm718 = vcmask 1043456
      %vm719 = vcmask 523268
      %vm720 = vmor %vm719, %vm718
      %721 = vst.msk [vmem:[#allocation4] sm:$0xff] %vm720, %v710
      %722 = vst.msk [vmem:[#allocation4 + $0x8] sm:$0xff] %vm720, %v711
      %723 = vst.msk [vmem:[#allocation4 + $0x10] sm:$0xff] %vm720, %v712
      %724 = vst.msk [vmem:[#allocation4 + $0x18] sm:$0xff] %vm720, %v713
      %725 = vst.msk [vmem:[#allocation4 + $0x20] sm:$0xff] %vm720, %v714
      %726 = vst.msk [vmem:[#allocation4 + $0x28] sm:$0xff] %vm720, %v715
      %727 = vst.msk [vmem:[#allocation4 + $0x30] sm:$0xff] %vm720, %v716
      %728 = vst.msk [vmem:[#allocation4 + $0x38] sm:$0xff] %vm720, %v717
      %v729 = vld [vmem:[#allocation4] sm:$0xf]
      %v730 = vld [vmem:[#allocation4 + $0x8] sm:$0xf]
      %v731 = vld [vmem:[#allocation4 + $0x10] sm:$0xf]
      %v732 = vld [vmem:[#allocation4 + $0x18] sm:$0xf]
      %v733 = vld [vmem:[#allocation4 + $0x20] sm:$0xf]
      %v734 = vld [vmem:[#allocation4 + $0x28] sm:$0xf]
      %v735 = vld [vmem:[#allocation4 + $0x30] sm:$0xf]
      %v736 = vld [vmem:[#allocation4 + $0x38] sm:$0xf]
      %v737 = vld [vmem:[#allocation4 + $0x4] sm:$0xf]
      %v738 = vld [vmem:[#allocation4 + $0xc] sm:$0xf]
      %v739 = vld [vmem:[#allocation4 + $0x14] sm:$0xf]
      %v740 = vld [vmem:[#allocation4 + $0x1c] sm:$0xf]
      %v741 = vld [vmem:[#allocation4 + $0x24] sm:$0xf]
      %v742 = vld [vmem:[#allocation4 + $0x2c] sm:$0xf]
      %v743 = vld [vmem:[#allocation4 + $0x34] sm:$0xf]
      %v744 = vld [vmem:[#allocation4 + $0x3c] sm:$0xf]
      %v753 = vunpack.c.l.b16 %v729
      %v754 = vunpack.c.l.b16 %v730
      %v755 = vunpack.c.l.b16 %v731
      %v756 = vunpack.c.l.b16 %v732
      %v757 = vunpack.c.l.b16 %v733
      %v758 = vunpack.c.l.b16 %v734
      %v759 = vunpack.c.l.b16 %v735
      %v760 = vunpack.c.l.b16 %v736
      %v761 = vpack.c.b16 %v754, %v753
      %v762 = vpack.c.b16 %v756, %v755
      %v763 = vpack.c.b16 %v758, %v757
      %v764 = vpack.c.b16 %v760, %v759
      %765 = vrot.lane.b32.xlu0 %v761, 64
      %v766 = vpop.permute.xlu0 %765
      %767 = vrot.lane.b32.xlu0 %v762, 64
      %v768 = vpop.permute.xlu0 %767
      %769 = vrot.lane.b32.xlu0 %v763, 64
      %v770 = vpop.permute.xlu0 %769
      %771 = vrot.lane.b32.xlu0 %v764, 64
      %v772 = vpop.permute.xlu0 %771
      %v774 = vsel %vm374, %v761, 0
      %v777 = vsel %vm374, %v762, 0
      %v780 = vsel %vm374, %v763, 0
      %v783 = vsel %vm374, %v764, 0
      %v786 = vsel %vm374, %v766, 0
      %v789 = vsel %vm374, %v768, 0
      %v792 = vsel %vm374, %v770, 0
      %v795 = vsel %vm374, %v772, 0
      %797 = vmatpush.bf16.xpose.msra.mxu0 0
      %798 = vmatpush.bf16.xpose.msra.mxu0 0
      %799 = vmatpush.bf16.xpose.msra.mxu0 0
      %800 = vmatpush.bf16.xpose.msra.mxu0 0
      %801 = vmatpush.bf16.xpose.msra.mxu0 %v795
      %802 = vmatpush.bf16.xpose.msra.mxu0 %v792
      %803 = vmatpush.bf16.xpose.msra.mxu0 %v789
      %804 = vmatpush.bf16.xpose.msra.mxu0 %v786
      %805 = vmatmul.bf16.gmra.mxu0 %v774
      %v806 = vpop.f32.mrf.mxu0
      %v807 = vadd.f32 0.0, %v806
      %v808 = vpop.f32.mrf.mxu0
      %v809 = vadd.f32 0.0, %v808
      %810 = vmatmul.bf16.gmra.mxu0 %v777
      %v811 = vpop.f32.mrf.mxu0
      %v812 = vadd.f32 0.0, %v811
      %v813 = vpop.f32.mrf.mxu0
      %v814 = vadd.f32 0.0, %v813
      %815 = vmatmul.bf16.gmra.mxu0 %v780
      %v816 = vpop.f32.mrf.mxu0
      %v817 = vadd.f32 0.0, %v816
      %v818 = vpop.f32.mrf.mxu0
      %v819 = vadd.f32 0.0, %v818
      %820 = vmatmul.bf16.gmra.mxu0 %v783
      %v821 = vpop.f32.mrf.mxu0
      %v822 = vadd.f32 0.0, %v821
      %v823 = vpop.f32.mrf.mxu0
      %v824 = vadd.f32 0.0, %v823
      %825 = vdwg.mxu0
      %v826 = vsel %vm328, %v807, -inf
      %827 = vmax.xlane.f32.xlu0 %v826
      %v828 = vpop.xlane.xlu0 %827
      %v829 = vsel %vm328, %v809, -inf
      %830 = vmax.xlane.f32.xlu0 %v829
      %v831 = vpop.xlane.xlu0 %830
      %v832 = vsel %vm328, %v812, -inf
      %833 = vmax.xlane.f32.xlu0 %v832
      %v834 = vpop.xlane.xlu0 %833
      %v835 = vsel %vm328, %v814, -inf
      %836 = vmax.xlane.f32.xlu0 %v835
      %v837 = vpop.xlane.xlu0 %836
      %v838 = vsel %vm328, %v817, -inf
      %839 = vmax.xlane.f32.xlu0 %v838
      %v840 = vpop.xlane.xlu0 %839
      %v841 = vsel %vm328, %v819, -inf
      %842 = vmax.xlane.f32.xlu0 %v841
      %v843 = vpop.xlane.xlu0 %842
      %v844 = vsel %vm328, %v822, -inf
      %845 = vmax.xlane.f32.xlu0 %v844
      %v846 = vpop.xlane.xlu0 %845
      %v847 = vsel %vm328, %v824, -inf
      %848 = vmax.xlane.f32.xlu0 %v847
      %v849 = vpop.xlane.xlu0 %848
      %v850 = vsub.f32 %v807, %v828
      %v851 = vsub.f32 %v809, %v831
      %v852 = vsub.f32 %v812, %v834
      %v853 = vsub.f32 %v814, %v837
      %v854 = vsub.f32 %v817, %v840
      %v855 = vsub.f32 %v819, %v843
      %v856 = vsub.f32 %v822, %v846
      %v857 = vsub.f32 %v824, %v849
      %v858 = vpack.c.bf16 %v851, %v850
      %v859 = vpack.c.bf16 %v853, %v852
      %v860 = vpack.c.bf16 %v855, %v854
      %v861 = vpack.c.bf16 %v857, %v856
      %v862 = vunpack.c.l.bf16 %v858
      %v863 = vunpack.c.h.bf16 %v858
      %v864 = vunpack.c.l.bf16 %v859
      %v865 = vunpack.c.h.bf16 %v859
      %v866 = vunpack.c.l.bf16 %v860
      %v867 = vunpack.c.h.bf16 %v860
      %v868 = vunpack.c.l.bf16 %v861
      %v869 = vunpack.c.h.bf16 %v861
      %v870 = vmul.f32 %v862, 1.442695
      %v871 = vpow.pop %v870
      %v872 = vmul.f32 %v863, 1.442695
      %v873 = vpow.pop %v872
      %v874 = vmul.f32 %v864, 1.442695
      %v875 = vpow.pop %v874
      %v876 = vmul.f32 %v865, 1.442695
      %v877 = vpow.pop %v876
      %v878 = vmul.f32 %v866, 1.442695
      %v879 = vpow.pop %v878
      %v880 = vmul.f32 %v867, 1.442695
      %v881 = vpow.pop %v880
      %v882 = vmul.f32 %v868, 1.442695
      %v883 = vpow.pop %v882
      %v884 = vmul.f32 %v869, 1.442695
      %v885 = vpow.pop %v884
      %v886 = vpack.c.bf16 %v873, %v871
      %v887 = vpack.c.bf16 %v877, %v875
      %v888 = vpack.c.bf16 %v881, %v879
      %v889 = vpack.c.bf16 %v885, %v883
      %v890 = vunpack.c.l.bf16 %v886
      %v891 = vunpack.c.h.bf16 %v886
      %v892 = vunpack.c.l.bf16 %v887
      %v893 = vunpack.c.h.bf16 %v887
      %v894 = vunpack.c.l.bf16 %v888
      %v895 = vunpack.c.h.bf16 %v888
      %v896 = vunpack.c.l.bf16 %v889
      %v897 = vunpack.c.h.bf16 %v889
      %v898 = vsel %vm328, %v890, 0.0
      %899 = vadd.xlane.f32.xlu0 %v898
      %v900 = vpop.xlane.xlu0 %899
      %v901 = vsel %vm328, %v891, 0.0
      %902 = vadd.xlane.f32.xlu0 %v901
      %v903 = vpop.xlane.xlu0 %902
      %v904 = vsel %vm328, %v892, 0.0
      %905 = vadd.xlane.f32.xlu0 %v904
      %v906 = vpop.xlane.xlu0 %905
      %v907 = vsel %vm328, %v893, 0.0
      %908 = vadd.xlane.f32.xlu0 %v907
      %v909 = vpop.xlane.xlu0 %908
      %v910 = vsel %vm328, %v894, 0.0
      %911 = vadd.xlane.f32.xlu0 %v910
      %v912 = vpop.xlane.xlu0 %911
      %v913 = vsel %vm328, %v895, 0.0
      %914 = vadd.xlane.f32.xlu0 %v913
      %v915 = vpop.xlane.xlu0 %914
      %v916 = vsel %vm328, %v896, 0.0
      %917 = vadd.xlane.f32.xlu0 %v916
      %v918 = vpop.xlane.xlu0 %917
      %v919 = vsel %vm328, %v897, 0.0
      %920 = vadd.xlane.f32.xlu0 %v919
      %v921 = vpop.xlane.xlu0 %920
      %v930 = vunpack.c.l.b16 %v737
      %v931 = vunpack.c.l.b16 %v738
      %v932 = vunpack.c.l.b16 %v739
      %v933 = vunpack.c.l.b16 %v740
      %v934 = vunpack.c.l.b16 %v741
      %v935 = vunpack.c.l.b16 %v742
      %v936 = vunpack.c.l.b16 %v743
      %v937 = vunpack.c.l.b16 %v744
      %v938 = vpack.c.b16 %v931, %v930
      %v939 = vpack.c.b16 %v933, %v932
      %v940 = vpack.c.b16 %v935, %v934
      %v941 = vpack.c.b16 %v937, %v936
      %v947 = vsel %vm328, %v886, 0
      %v950 = vsel %vm328, %v887, 0
      %v953 = vsel %vm328, %v888, 0
      %v956 = vsel %vm328, %v889, 0
      %958 = vmatpush.bf16.msra.mxu0 0
      %959 = vmatpush.bf16.msra.mxu0 0
      %960 = vmatpush.bf16.msra.mxu0 0
      %961 = vmatpush.bf16.msra.mxu0 0
      %962 = vmatpush.bf16.msra.mxu0 %v941
      %963 = vmatpush.bf16.msra.mxu0 %v940
      %964 = vmatpush.bf16.msra.mxu0 %v939
      %965 = vmatpush.bf16.msra.mxu0 %v938
      %966 = vmatmul.bf16.gmra.mxu0 %v947
      %v967 = vpop.f32.mrf.mxu0
      %v968 = vadd.f32 0.0, %v967
      %v969 = vpop.f32.mrf.mxu0
      %v970 = vadd.f32 0.0, %v969
      %971 = vmatmul.bf16.gmra.mxu0 %v950
      %v972 = vpop.f32.mrf.mxu0
      %v973 = vadd.f32 0.0, %v972
      %v974 = vpop.f32.mrf.mxu0
      %v975 = vadd.f32 0.0, %v974
      %976 = vmatmul.bf16.gmra.mxu0 %v953
      %v977 = vpop.f32.mrf.mxu0
      %v978 = vadd.f32 0.0, %v977
      %v979 = vpop.f32.mrf.mxu0
      %v980 = vadd.f32 0.0, %v979
      %981 = vmatmul.bf16.gmra.mxu0 %v956
      %v982 = vpop.f32.mrf.mxu0
      %v983 = vadd.f32 0.0, %v982
      %v984 = vpop.f32.mrf.mxu0
      %v985 = vadd.f32 0.0, %v984
      %986 = vdwg.mxu0
      %v987 = vrcp.pop %v900
      %v988 = vrcp.pop %v903
      %v989 = vrcp.pop %v906
      %v990 = vrcp.pop %v909
      %v991 = vrcp.pop %v912
      %v992 = vrcp.pop %v915
      %v993 = vrcp.pop %v918
      %v994 = vrcp.pop %v921
      %v995 = vmul.f32 %v968, %v987
      %v996 = vmul.f32 %v970, %v988
      %v997 = vmul.f32 %v973, %v989
      %v998 = vmul.f32 %v975, %v990
      %v999 = vmul.f32 %v978, %v991
      %v1000 = vmul.f32 %v980, %v992
      %v1001 = vmul.f32 %v983, %v993
      %v1002 = vmul.f32 %v985, %v994
      %1003 = vrot.lane.b32.xlu0 %v761, 96
      %v1004 = vpop.permute.xlu0 %1003
      %1005 = vrot.lane.b32.xlu0 %v762, 96
      %v1006 = vpop.permute.xlu0 %1005
      %1007 = vrot.lane.b32.xlu0 %v763, 96
      %v1008 = vpop.permute.xlu0 %1007
      %1009 = vrot.lane.b32.xlu0 %v764, 96
      %v1010 = vpop.permute.xlu0 %1009
      %1011 = vrot.lane.b32.xlu0 %v761, 32
      %v1012 = vpop.permute.xlu0 %1011
      %1013 = vrot.lane.b32.xlu0 %v762, 32
      %v1014 = vpop.permute.xlu0 %1013
      %1015 = vrot.lane.b32.xlu0 %v763, 32
      %v1016 = vpop.permute.xlu0 %1015
      %1017 = vrot.lane.b32.xlu0 %v764, 32
      %v1018 = vpop.permute.xlu0 %1017
      %v1020 = vsel %vm374, %v1004, 0
      %v1023 = vsel %vm374, %v1006, 0
      %v1026 = vsel %vm374, %v1008, 0
      %v1029 = vsel %vm374, %v1010, 0
      %v1032 = vsel %vm374, %v1012, 0
      %v1035 = vsel %vm374, %v1014, 0
      %v1038 = vsel %vm374, %v1016, 0
      %v1041 = vsel %vm374, %v1018, 0
      %1043 = vmatpush.bf16.xpose.msra.mxu0 0
      %1044 = vmatpush.bf16.xpose.msra.mxu0 0
      %1045 = vmatpush.bf16.xpose.msra.mxu0 0
      %1046 = vmatpush.bf16.xpose.msra.mxu0 0
      %1047 = vmatpush.bf16.xpose.msra.mxu0 %v1041
      %1048 = vmatpush.bf16.xpose.msra.mxu0 %v1038
      %1049 = vmatpush.bf16.xpose.msra.mxu0 %v1035
      %1050 = vmatpush.bf16.xpose.msra.mxu0 %v1032
      %1051 = vmatmul.bf16.gmra.mxu0 %v1020
      %v1052 = vpop.f32.mrf.mxu0
      %v1053 = vadd.f32 0.0, %v1052
      %v1054 = vpop.f32.mrf.mxu0
      %v1055 = vadd.f32 0.0, %v1054
      %1056 = vmatmul.bf16.gmra.mxu0 %v1023
      %v1057 = vpop.f32.mrf.mxu0
      %v1058 = vadd.f32 0.0, %v1057
      %v1059 = vpop.f32.mrf.mxu0
      %v1060 = vadd.f32 0.0, %v1059
      %1061 = vmatmul.bf16.gmra.mxu0 %v1026
      %v1062 = vpop.f32.mrf.mxu0
      %v1063 = vadd.f32 0.0, %v1062
      %v1064 = vpop.f32.mrf.mxu0
      %v1065 = vadd.f32 0.0, %v1064
      %1066 = vmatmul.bf16.gmra.mxu0 %v1029
      %v1067 = vpop.f32.mrf.mxu0
      %v1068 = vadd.f32 0.0, %v1067
      %v1069 = vpop.f32.mrf.mxu0
      %v1070 = vadd.f32 0.0, %v1069
      %1071 = vdwg.mxu0
      %v1072 = vsel %vm328, %v1053, -inf
      %1073 = vmax.xlane.f32.xlu0 %v1072
      %v1074 = vpop.xlane.xlu0 %1073
      %v1075 = vsel %vm328, %v1055, -inf
      %1076 = vmax.xlane.f32.xlu0 %v1075
      %v1077 = vpop.xlane.xlu0 %1076
      %v1078 = vsel %vm328, %v1058, -inf
      %1079 = vmax.xlane.f32.xlu0 %v1078
      %v1080 = vpop.xlane.xlu0 %1079
      %v1081 = vsel %vm328, %v1060, -inf
      %1082 = vmax.xlane.f32.xlu0 %v1081
      %v1083 = vpop.xlane.xlu0 %1082
      %v1084 = vsel %vm328, %v1063, -inf
      %1085 = vmax.xlane.f32.xlu0 %v1084
      %v1086 = vpop.xlane.xlu0 %1085
      %v1087 = vsel %vm328, %v1065, -inf
      %1088 = vmax.xlane.f32.xlu0 %v1087
      %v1089 = vpop.xlane.xlu0 %1088
      %v1090 = vsel %vm328, %v1068, -inf
      %1091 = vmax.xlane.f32.xlu0 %v1090
      %v1092 = vpop.xlane.xlu0 %1091
      %v1093 = vsel %vm328, %v1070, -inf
      %1094 = vmax.xlane.f32.xlu0 %v1093
      %v1095 = vpop.xlane.xlu0 %1094
      %v1096 = vsub.f32 %v1053, %v1074
      %v1097 = vsub.f32 %v1055, %v1077
      %v1098 = vsub.f32 %v1058, %v1080
      %v1099 = vsub.f32 %v1060, %v1083
      %v1100 = vsub.f32 %v1063, %v1086
      %v1101 = vsub.f32 %v1065, %v1089
      %v1102 = vsub.f32 %v1068, %v1092
      %v1103 = vsub.f32 %v1070, %v1095
      %v1104 = vpack.c.bf16 %v1097, %v1096
      %v1105 = vpack.c.bf16 %v1099, %v1098
      %v1106 = vpack.c.bf16 %v1101, %v1100
      %v1107 = vpack.c.bf16 %v1103, %v1102
      %v1108 = vunpack.c.l.bf16 %v1104
      %v1109 = vunpack.c.h.bf16 %v1104
      %v1110 = vunpack.c.l.bf16 %v1105
      %v1111 = vunpack.c.h.bf16 %v1105
      %v1112 = vunpack.c.l.bf16 %v1106
      %v1113 = vunpack.c.h.bf16 %v1106
      %v1114 = vunpack.c.l.bf16 %v1107
      %v1115 = vunpack.c.h.bf16 %v1107
      %v1116 = vmul.f32 %v1108, 1.442695
      %v1117 = vpow.pop %v1116
      %v1118 = vmul.f32 %v1109, 1.442695
      %v1119 = vpow.pop %v1118
      %v1120 = vmul.f32 %v1110, 1.442695
      %v1121 = vpow.pop %v1120
      %v1122 = vmul.f32 %v1111, 1.442695
      %v1123 = vpow.pop %v1122
      %v1124 = vmul.f32 %v1112, 1.442695
      %v1125 = vpow.pop %v1124
      %v1126 = vmul.f32 %v1113, 1.442695
      %v1127 = vpow.pop %v1126
      %v1128 = vmul.f32 %v1114, 1.442695
      %v1129 = vpow.pop %v1128
      %v1130 = vmul.f32 %v1115, 1.442695
      %v1131 = vpow.pop %v1130
      %v1132 = vpack.c.bf16 %v1119, %v1117
      %v1133 = vpack.c.bf16 %v1123, %v1121
      %v1134 = vpack.c.bf16 %v1127, %v1125
      %v1135 = vpack.c.bf16 %v1131, %v1129
      %v1136 = vunpack.c.l.bf16 %v1132
      %v1137 = vunpack.c.h.bf16 %v1132
      %v1138 = vunpack.c.l.bf16 %v1133
      %v1139 = vunpack.c.h.bf16 %v1133
      %v1140 = vunpack.c.l.bf16 %v1134
      %v1141 = vunpack.c.h.bf16 %v1134
      %v1142 = vunpack.c.l.bf16 %v1135
      %v1143 = vunpack.c.h.bf16 %v1135
      %v1144 = vsel %vm328, %v1136, 0.0
      %1145 = vadd.xlane.f32.xlu0 %v1144
      %v1146 = vpop.xlane.xlu0 %1145
      %v1147 = vsel %vm328, %v1137, 0.0
      %1148 = vadd.xlane.f32.xlu0 %v1147
      %v1149 = vpop.xlane.xlu0 %1148
      %v1150 = vsel %vm328, %v1138, 0.0
      %1151 = vadd.xlane.f32.xlu0 %v1150
      %v1152 = vpop.xlane.xlu0 %1151
      %v1153 = vsel %vm328, %v1139, 0.0
      %1154 = vadd.xlane.f32.xlu0 %v1153
      %v1155 = vpop.xlane.xlu0 %1154
      %v1156 = vsel %vm328, %v1140, 0.0
      %1157 = vadd.xlane.f32.xlu0 %v1156
      %v1158 = vpop.xlane.xlu0 %1157
      %v1159 = vsel %vm328, %v1141, 0.0
      %1160 = vadd.xlane.f32.xlu0 %v1159
      %v1161 = vpop.xlane.xlu0 %1160
      %v1162 = vsel %vm328, %v1142, 0.0
      %1163 = vadd.xlane.f32.xlu0 %v1162
      %v1164 = vpop.xlane.xlu0 %1163
      %v1165 = vsel %vm328, %v1143, 0.0
      %1166 = vadd.xlane.f32.xlu0 %v1165
      %v1167 = vpop.xlane.xlu0 %1166
      %1168 = vrot.lane.b32.xlu0 %v938, 96
      %v1169 = vpop.permute.xlu0 %1168
      %1170 = vrot.lane.b32.xlu0 %v939, 96
      %v1171 = vpop.permute.xlu0 %1170
      %1172 = vrot.lane.b32.xlu0 %v940, 96
      %v1173 = vpop.permute.xlu0 %1172
      %1174 = vrot.lane.b32.xlu0 %v941, 96
      %v1175 = vpop.permute.xlu0 %1174
      %v1181 = vsel %vm328, %v1132, 0
      %v1184 = vsel %vm328, %v1133, 0
      %v1187 = vsel %vm328, %v1134, 0
      %v1190 = vsel %vm328, %v1135, 0
      %1192 = vmatpush.bf16.msra.mxu0 0
      %1193 = vmatpush.bf16.msra.mxu0 0
      %1194 = vmatpush.bf16.msra.mxu0 0
      %1195 = vmatpush.bf16.msra.mxu0 0
      %1196 = vmatpush.bf16.msra.mxu0 %v1175
      %1197 = vmatpush.bf16.msra.mxu0 %v1173
      %1198 = vmatpush.bf16.msra.mxu0 %v1171
      %1199 = vmatpush.bf16.msra.mxu0 %v1169
      %1200 = vmatmul.bf16.gmra.mxu0 %v1181
      %v1201 = vpop.f32.mrf.mxu0
      %v1202 = vadd.f32 0.0, %v1201
      %v1203 = vpop.f32.mrf.mxu0
      %v1204 = vadd.f32 0.0, %v1203
      %1205 = vmatmul.bf16.gmra.mxu0 %v1184
      %v1206 = vpop.f32.mrf.mxu0
      %v1207 = vadd.f32 0.0, %v1206
      %v1208 = vpop.f32.mrf.mxu0
      %v1209 = vadd.f32 0.0, %v1208
      %1210 = vmatmul.bf16.gmra.mxu0 %v1187
      %v1211 = vpop.f32.mrf.mxu0
      %v1212 = vadd.f32 0.0, %v1211
      %v1213 = vpop.f32.mrf.mxu0
      %v1214 = vadd.f32 0.0, %v1213
      %1215 = vmatmul.bf16.gmra.mxu0 %v1190
      %v1216 = vpop.f32.mrf.mxu0
      %v1217 = vadd.f32 0.0, %v1216
      %v1218 = vpop.f32.mrf.mxu0
      %v1219 = vadd.f32 0.0, %v1218
      %1220 = vdwg.mxu0
      %v1221 = vrcp.pop %v1146
      %v1222 = vrcp.pop %v1149
      %v1223 = vrcp.pop %v1152
      %v1224 = vrcp.pop %v1155
      %v1225 = vrcp.pop %v1158
      %v1226 = vrcp.pop %v1161
      %v1227 = vrcp.pop %v1164
      %v1228 = vrcp.pop %v1167
      %v1229 = vmul.f32 %v1202, %v1221
      %v1230 = vmul.f32 %v1204, %v1222
      %v1231 = vmul.f32 %v1207, %v1223
      %v1232 = vmul.f32 %v1209, %v1224
      %v1233 = vmul.f32 %v1212, %v1225
      %v1234 = vmul.f32 %v1214, %v1226
      %v1235 = vmul.f32 %v1217, %v1227
      %v1236 = vmul.f32 %v1219, %v1228
      %1245 = vrot.lane.b32.xlu0 %v1229, 32
      %v1246 = vpop.permute.xlu0 %1245
      %1247 = vrot.lane.b32.xlu0 %v1230, 32
      %v1248 = vpop.permute.xlu0 %1247
      %1249 = vrot.lane.b32.xlu0 %v1231, 32
      %v1250 = vpop.permute.xlu0 %1249
      %1251 = vrot.lane.b32.xlu0 %v1232, 32
      %v1252 = vpop.permute.xlu0 %1251
      %1253 = vrot.lane.b32.xlu0 %v1233, 32
      %v1254 = vpop.permute.xlu0 %1253
      %1255 = vrot.lane.b32.xlu0 %v1234, 32
      %v1256 = vpop.permute.xlu0 %1255
      %1257 = vrot.lane.b32.xlu0 %v1235, 32
      %v1258 = vpop.permute.xlu0 %1257
      %1259 = vrot.lane.b32.xlu0 %v1236, 32
      %v1260 = vpop.permute.xlu0 %1259
      %v1269 = vsel %vm374, %v995, %v1246
      %v1270 = vsel %vm374, %v996, %v1248
      %v1271 = vsel %vm374, %v997, %v1250
      %v1272 = vsel %vm374, %v998, %v1252
      %v1273 = vsel %vm374, %v999, %v1254
      %v1274 = vsel %vm374, %v1000, %v1256
      %v1275 = vsel %vm374, %v1001, %v1258
      %v1276 = vsel %vm374, %v1002, %v1260
      %v1277 = vpack.c.bf16 %v1269, %v1269
      %v1278 = vpack.c.bf16 %v1270, %v1270
      %v1279 = vpack.c.bf16 %v1271, %v1271
      %v1280 = vpack.c.bf16 %v1272, %v1272
      %v1281 = vpack.c.bf16 %v1273, %v1273
      %v1282 = vpack.c.bf16 %v1274, %v1274
      %v1283 = vpack.c.bf16 %v1275, %v1275
      %v1284 = vpack.c.bf16 %v1276, %v1276
      %1285 = vst.msk [vmem:[#allocation3] sm:$0xf] %vm549, %v1277
      %1286 = vst.msk [vmem:[#allocation3 + $0x4] sm:$0xf] %vm549, %v1278
      %1287 = vst.msk [vmem:[#allocation3 + $0x8] sm:$0xf] %vm549, %v1279
      %1288 = vst.msk [vmem:[#allocation3 + $0xc] sm:$0xf] %vm549, %v1280
      %1289 = vst.msk [vmem:[#allocation3 + $0x10] sm:$0xf] %vm549, %v1281
      %1290 = vst.msk [vmem:[#allocation3 + $0x14] sm:$0xf] %vm549, %v1282
      %1291 = vst.msk [vmem:[#allocation3 + $0x18] sm:$0xf] %vm549, %v1283
      %1292 = vst.msk [vmem:[#allocation3 + $0x1c] sm:$0xf] %vm549, %v1284
      %v1293 = vld [vmem:[#allocation3] sm:$0xf]
      %v1294 = vld [vmem:[#allocation3 + $0x4] sm:$0xf]
      %v1295 = vld [vmem:[#allocation3 + $0x8] sm:$0xf]
      %v1296 = vld [vmem:[#allocation3 + $0xc] sm:$0xf]
      %v1297 = vld [vmem:[#allocation3 + $0x10] sm:$0xf]
      %v1298 = vld [vmem:[#allocation3 + $0x14] sm:$0xf]
      %v1299 = vld [vmem:[#allocation3 + $0x18] sm:$0xf]
      %v1300 = vld [vmem:[#allocation3 + $0x1c] sm:$0xf]
      %v1301 = vld [vmem:[%s6] sm:$0xf]
      %v1302 = vld [vmem:[%s6 + $0x4] sm:$0xf]
      %v1303 = vld [vmem:[%s6 + $0x8] sm:$0xf]
      %v1304 = vld [vmem:[%s6 + $0xc] sm:$0xf]
      %v1305 = vld [vmem:[%s6 + $0x10] sm:$0xf]
      %v1306 = vld [vmem:[%s6 + $0x14] sm:$0xf]
      %v1307 = vld [vmem:[%s6 + $0x18] sm:$0xf]
      %v1308 = vld [vmem:[%s6 + $0x1c] sm:$0xf]
      %v1309 = vld [vmem:[%s7] sm:$0x1]
      %v1311 = vperm.slane %v1309, 0
      %v1321 = vunpack.c.l.b16 %v1293
      %v1322 = vunpack.c.l.b16 %v1294
      %v1323 = vunpack.c.l.b16 %v1295
      %v1324 = vunpack.c.l.b16 %v1296
      %v1325 = vunpack.c.l.b16 %v1297
      %v1326 = vunpack.c.l.b16 %v1298
      %v1327 = vunpack.c.l.b16 %v1299
      %v1328 = vunpack.c.l.b16 %v1300
      %v1329 = vpack.c.b16 %v1322, %v1321
      %v1330 = vpack.c.b16 %v1324, %v1323
      %v1331 = vpack.c.b16 %v1326, %v1325
      %v1332 = vpack.c.b16 %v1328, %v1327
      %v1341 = vunpack.c.l.b16 %v1301
      %v1342 = vunpack.c.l.b16 %v1302
      %v1343 = vunpack.c.l.b16 %v1303
      %v1344 = vunpack.c.l.b16 %v1304
      %v1345 = vunpack.c.l.b16 %v1305
      %v1346 = vunpack.c.l.b16 %v1306
      %v1347 = vunpack.c.l.b16 %v1307
      %v1348 = vunpack.c.l.b16 %v1308
      %v1349 = vpack.c.b16 %v1342, %v1341
      %v1350 = vpack.c.b16 %v1344, %v1343
      %v1351 = vpack.c.b16 %v1346, %v1345
      %v1352 = vpack.c.b16 %v1348, %v1347
      %v1358 = vsel %vm328, %v1329, 0
      %v1361 = vsel %vm328, %v1330, 0
      %v1364 = vsel %vm328, %v1331, 0
      %v1367 = vsel %vm328, %v1332, 0
      %1369 = vmatpush.bf16.msra.mxu0 0
      %1370 = vmatpush.bf16.msra.mxu0 0
      %1371 = vmatpush.bf16.msra.mxu0 0
      %1372 = vmatpush.bf16.msra.mxu0 0
      %1373 = vmatpush.bf16.msra.mxu0 %v1352
      %1374 = vmatpush.bf16.msra.mxu0 %v1351
      %1375 = vmatpush.bf16.msra.mxu0 %v1350
      %1376 = vmatpush.bf16.msra.mxu0 %v1349
      %1377 = vmatmul.bf16.gmra.mxu0 %v1358
      %v1378 = vpop.f32.mrf.mxu0
      %v1379 = vadd.f32 %v1311, %v1378
      %v1380 = vpop.f32.mrf.mxu0
      %v1381 = vadd.f32 %v1311, %v1380
      %1382 = vmatmul.bf16.gmra.mxu0 %v1361
      %v1383 = vpop.f32.mrf.mxu0
      %v1384 = vadd.f32 %v1311, %v1383
      %v1385 = vpop.f32.mrf.mxu0
      %v1386 = vadd.f32 %v1311, %v1385
      %1387 = vmatmul.bf16.gmra.mxu0 %v1364
      %v1388 = vpop.f32.mrf.mxu0
      %v1389 = vadd.f32 %v1311, %v1388
      %v1390 = vpop.f32.mrf.mxu0
      %v1391 = vadd.f32 %v1311, %v1390
      %1392 = vmatmul.bf16.gmra.mxu0 %v1367
      %v1393 = vpop.f32.mrf.mxu0
      %v1394 = vadd.f32 %v1311, %v1393
      %v1395 = vpop.f32.mrf.mxu0
      %v1396 = vadd.f32 %v1311, %v1395
      %1397 = vdwg.mxu0
      %v1398 = vld [vmem:[%s301] sm:$0xff]
      %v1399 = vld [vmem:[%s301 + $0x8] sm:$0xff]
      %v1400 = vld [vmem:[%s301 + $0x10] sm:$0xff]
      %v1401 = vld [vmem:[%s301 + $0x18] sm:$0xff]
      %v1402 = vld [vmem:[%s301 + $0x20] sm:$0xff]
      %v1403 = vld [vmem:[%s301 + $0x28] sm:$0xff]
      %v1404 = vld [vmem:[%s301 + $0x30] sm:$0xff]
      %v1405 = vld [vmem:[%s301 + $0x38] sm:$0xff]
      %v1406 = vadd.f32 %v1398, %v1379
      %v1407 = vadd.f32 %v1399, %v1381
      %v1408 = vadd.f32 %v1400, %v1384
      %v1409 = vadd.f32 %v1401, %v1386
      %v1410 = vadd.f32 %v1402, %v1389
      %v1411 = vadd.f32 %v1403, %v1391
      %v1412 = vadd.f32 %v1404, %v1394
      %v1413 = vadd.f32 %v1405, %v1396
      %1414 = vst.msk [vmem:[%s307] sm:$0xff] %vm328, %v1406
      %1415 = vst.msk [vmem:[%s307 + $0x8] sm:$0xff] %vm328, %v1407
      %1416 = vst.msk [vmem:[%s307 + $0x10] sm:$0xff] %vm328, %v1408
      %1417 = vst.msk [vmem:[%s307 + $0x18] sm:$0xff] %vm328, %v1409
      %1418 = vst.msk [vmem:[%s307 + $0x20] sm:$0xff] %vm328, %v1410
      %1419 = vst.msk [vmem:[%s307 + $0x28] sm:$0xff] %vm328, %v1411
      %1420 = vst.msk [vmem:[%s307 + $0x30] sm:$0xff] %vm328, %v1412
      %1421 = vst.msk [vmem:[%s307 + $0x38] sm:$0xff] %vm328, %v1413
      %s1422 = smul.u32 8, %s19
      %p1423 = scmp.lt.s32.totalorder %s1422, 15
      %s1424 = scalar_select %p1423, %s1422, 15
      %s1425 = smul.addr %s1424, 8
      %s1426 = scalar_lea.vmem %s8, %s1425
      // Predicated region
      $region53: #{tpu_custom_call.1} parent=51 // pred_check
        %p1427 = pneg %p210
      $region54: #{tpu_custom_call.1} parent=51 // pred_check_branch
        %1429 = sbr.rel (%p1427) target = $region56
      $region55: #{tpu_custom_call.1} parent=51 // pred_region
        %s1430 = smul.u32 8, %s19
      $region56: #{tpu_custom_call.1} parent=51 // pred_fallthru
        _
    $region52: #{tpu_custom_call.1} parent=5 // pred_fallthru
      _
    %p1431 = scmp.le.s32.totalorder 2, %s14
    // Predicated region
    $region57: #{tpu_custom_call.1} parent=5 // pred_check
      %p1432 = pneg %p1431
    $region58: #{tpu_custom_call.1} parent=5 // pred_check_branch
      %1434 = sbr.rel (%p1432) target = $region60
    $region59: #{tpu_custom_call.1} parent=5 // pred_region
      %s1435 = ssub.s32 %s14, 2
      // Predicated region
      $region61: #{tpu_custom_call.1} parent=59 // pred_check
        %p1436 = pneg %p216
      $region62: #{tpu_custom_call.1} parent=59 // pred_check_branch
        %1438 = sbr.rel (%p1436) target = $region64
      $region63: #{tpu_custom_call.1} parent=59 // pred_region
        %s1439 = smul.u32 8, %s20
        %p1440 = scmp.lt.s32.totalorder %s1439, 15
        %s1441 = scalar_select %p1440, %s1439, 15
        %s1442 = smul.addr %s1441, 8
        %s1443 = scalar_lea.vmem %s8, %s1442
      $region64: #{tpu_custom_call.1} parent=59 // pred_fallthru
        _
    $region60: #{tpu_custom_call.1} parent=5 // pred_fallthru
      _
  $region6: #{tpu_custom_call.1} parent=0 // loop_footer
    %s18 = sadd.s32 1, %s14
  $region7: #{tpu_custom_call.1} parent=0 // loop_footer_branch
    %13 = sbr.rel target = $region3
  $region8: #{tpu_custom_call.1} parent=0 // loop_exit
    _

</llo_original>
